<compile_context>
chip_gen: v7x
topology: tpu7x:2x2x1
jax: 0.10.0
libtpu: 0.0.40
codegen_flags: <defaults>
</compile_context>

<pallas_src>
import functools

import jax
import jax.numpy as jnp
from jax import lax
from jax.experimental import pallas as pl
from jax.experimental.pallas import tpu as pltpu


# -----------------------------------------------------------------------------
# Tiling helpers
# -----------------------------------------------------------------------------
def _pick_m_tile(m, target=512, align=8):
    """Largest sensible multiple-of-`align` divisor of m near `target`."""
    if m <= target:
        return m
    cands = [t for t in range(align, min(m, 2 * target) + 1, align) if m % t == 0]
    if not cands:
        return m  # full-extent block is always legal
    return min(cands, key=lambda t: abs(t - target))


def _pick_k_tile(k, target=512):
    """Contraction tile: multiple of 128 (lane width) dividing k, near target."""
    if k <= target:
        return k
    cands = [t for t in range(128, min(k, 4 * target) + 1, 128) if k % t == 0]
    if not cands:
        return k
    return min(cands, key=lambda t: abs(t - target))


# -----------------------------------------------------------------------------
# Kernel: tiled GEMM + (folded-BN) bias + SiLU
#   x:(M,K) @ w:(K,Cout) -> out:(M,Cout), accumulated in f32 VMEM scratch.
# -----------------------------------------------------------------------------
def _gemm_bn_silu_kernel(x_ref, w_ref, b_ref, o_ref, acc_ref, *, apply_silu):
    kk = pl.program_id(1)

    @pl.when(kk == 0)
    def _():
        acc_ref[...] = jnp.zeros_like(acc_ref)

    acc_ref[...] += jnp.dot(
        x_ref[...].astype(jnp.float32),
        w_ref[...].astype(jnp.float32),
        preferred_element_type=jnp.float32,
    )

    @pl.when(kk == pl.num_programs(1) - 1)
    def _():
        y = acc_ref[...] + b_ref[...]          # BN scale already folded into w
        if apply_silu:                          # SiLU: y * sigmoid(y)
            y = y * (1.0 / (1.0 + jnp.exp(-y)))
        o_ref[...] = y.astype(o_ref.dtype)


def _gemm_bn_silu(x2d, w2d, bias2d, *, apply_silu, row_tile=512):
    M, K = x2d.shape
    Cout = w2d.shape[1]
    tm = _pick_m_tile(M, row_tile)
    tk = _pick_k_tile(K)
    grid = (M // tm, K // tk)

    cost = pl.CostEstimate(
        flops=2 * M * K * Cout + (4 if apply_silu else 1) * M * Cout,
        transcendentals=(M * Cout) if apply_silu else 0,
        bytes_accessed=4 * (M * K + K * Cout + Cout + M * Cout),
    )

    return pl.pallas_call(
        functools.partial(_gemm_bn_silu_kernel, apply_silu=apply_silu),
        out_shape=jax.ShapeDtypeStruct((M, Cout), jnp.float32),
        grid=grid,
        in_specs=[
            pl.BlockSpec((tm, tk), lambda i, kk: (i, kk)),
            pl.BlockSpec((tk, Cout), lambda i, kk: (kk, 0)),
            pl.BlockSpec((1, Cout), lambda i, kk: (0, 0)),
        ],
        out_specs=pl.BlockSpec((tm, Cout), lambda i, kk: (i, 0)),
        scratch_shapes=[pltpu.VMEM((tm, Cout), jnp.float32)],
        compiler_params=pltpu.CompilerParams(
            dimension_semantics=("parallel", "arbitrary"),
            vmem_limit_bytes=32 * 1024 * 1024,
        ),
        cost_estimate=cost,
    )(x2d, w2d, bias2d)


# -----------------------------------------------------------------------------
# Conv block forward: SiLU(BN(Conv2d(x)))      (NCHW in / NCHW out)
# -----------------------------------------------------------------------------
def conv_bn_silu_forward(x_nchw, weight_oihw, gamma, beta, mean, var, *,
                         stride=1, padding=None, eps=1e-5, act=True,
                         row_tile=512):
    N, Cin, H, W = x_nchw.shape
    Cout, _, kH, kW = weight_oihw.shape
    s = stride
    ph = (kH // 2) if padding is None else padding      # autopad(k, p)
    pw = (kW // 2) if padding is None else padding

    H_out = (H + 2 * ph - kH) // s + 1
    W_out = (W + 2 * pw - kW) // s + 1

    x = jnp.transpose(x_nchw, (0, 2, 3, 1))             # NCHW -> NHWC

    if kH == 1 and kW == 1 and s == 1 and ph == 0 and pw == 0:
        patches = x                                      # pointwise conv: no im2col
    else:
        xp = jnp.pad(x, ((0, 0), (ph, ph), (pw, pw), (0, 0)))
        cols = []
        for kh in range(kH):
            for kw in range(kW):
                cols.append(xp[:, kh: kh + (H_out - 1) * s + 1: s,
                               kw: kw + (W_out - 1) * s + 1: s, :])
        patches = jnp.concatenate(cols, axis=-1)         # (N,Ho,Wo,kH*kW*Cin)

    K = kH * kW * Cin
    M = N * H_out * W_out
    x2d = patches.reshape(M, K).astype(jnp.float32)

    # Fold eval-mode BN into the conv weight + a bias (host-side, free).
    scale = gamma / jnp.sqrt(var + eps)
    bias = beta - mean * scale
    w2d = jnp.transpose(weight_oihw, (2, 3, 1, 0)).reshape(K, Cout)
    w2d = (w2d * scale[None, :]).astype(jnp.float32)
    bias2d = bias.reshape(1, Cout).astype(jnp.float32)

    out2d = _gemm_bn_silu(x2d, w2d, bias2d, apply_silu=bool(act),
                          row_tile=row_tile)
    out = out2d.reshape(N, H_out, W_out, Cout)
    return jnp.transpose(out, (0, 3, 1, 2))              # NHWC -> NCHW


# -----------------------------------------------------------------------------
# Pure-JAX reference (independent path: lax.conv + BN + SiLU)
# -----------------------------------------------------------------------------
def ref_conv_bn_silu(x_nchw, weight_oihw, gamma, beta, mean, var, *,
                     stride=1, padding=None, eps=1e-5, act=True):
    kH, kW = weight_oihw.shape[2], weight_oihw.shape[3]
    ph = (kH // 2) if padding is None else padding
    pw = (kW // 2) if padding is None else padding
    y = lax.conv_general_dilated(
        x_nchw.astype(jnp.float32), weight_oihw.astype(jnp.float32),
        window_strides=(stride, stride), padding=[(ph, ph), (pw, pw)],
        dimension_numbers=("NCHW", "OIHW", "NCHW"))
    scale = gamma / jnp.sqrt(var + eps)
    bias = beta - mean * scale
    y = y * scale[None, :, None, None] + bias[None, :, None, None]
    if act:
        y = y * jax.nn.sigmoid(y)
    return y


def make_bn_params(key, c):
    kg, kb, km, kv = jax.random.split(key, 4)
    gamma = 1.0 + 0.1 * jax.random.normal(kg, (c,), jnp.float32)
    beta = 0.1 * jax.random.normal(kb, (c,), jnp.float32)
    mean = 0.1 * jax.random.normal(km, (c,), jnp.float32)
    var = jnp.abs(jax.random.normal(kv, (c,), jnp.float32)) + 0.5
    return gamma, beta, mean, var


if __name__ == "__main__":
    key = jax.random.PRNGKey(0)
    kx, kw1, kbn1, kw3, kbn3 = jax.random.split(key, 5)

    N, C1, H, W = 2, 4, 16, 16
    C2 = 8
    x = jax.random.normal(kx, (N, C1, H, W), jnp.float32)

    # ---- default Conv: k=1, s=1 (pointwise) -------------------------------
    w1 = 0.2 * jax.random.normal(kw1, (C2, C1, 1, 1), jnp.float32)
    g1, b1, m1, v1 = make_bn_params(kbn1, C2)

    fwd1 = jax.jit(functools.partial(conv_bn_silu_forward, stride=1, act=True))
    out1 = jax.block_until_ready(fwd1(x, w1, g1, b1, m1, v1))
    ref1 = ref_conv_bn_silu(x, w1, g1, b1, m1, v1, stride=1, act=True)
    assert out1.shape == (N, C2, H, W), out1.shape
    assert jnp.allclose(out1, ref1, atol=1e-4, rtol=1e-4), \
        float(jnp.max(jnp.abs(out1 - ref1)))

    # ---- general path: k=3, s=2 (autopad=1) -------------------------------
    w3 = 0.2 * jax.random.normal(kw3, (C2, C1, 3, 3), jnp.float32)
    g3, b3, m3, v3 = make_bn_params(kbn3, C2)

    fwd3 = jax.jit(functools.partial(conv_bn_silu_forward, stride=2, act=True))
    out3 = jax.block_until_ready(fwd3(x, w3, g3, b3, m3, v3))
    ref3 = ref_conv_bn_silu(x, w3, g3, b3, m3, v3, stride=2, act=True)
    assert out3.shape == (N, C2, 8, 8), out3.shape
    assert jnp.allclose(out3, ref3, atol=1e-4, rtol=1e-4), \
        float(jnp.max(jnp.abs(out3 - ref3)))

    print("KERNEL_OK")
</pallas_src>

<mosaic_0001>
module attributes {stable_mosaic.version = 11 : i64} {
  func.func @_gemm_bn_silu_kernel(%arg0: i32, %arg1: i32, %arg2: memref<512x4xf32, #tpu.memory_space<vmem>>, %arg3: memref<4x8xf32, #tpu.memory_space<vmem>>, %arg4: memref<1x8xf32, #tpu.memory_space<vmem>>, %arg5: memref<512x8xf32, #tpu.memory_space<vmem>>, %arg6: memref<512x8xf32, #tpu.memory_space<vmem>>) attributes {dimension_semantics = [#tpu.dimension_semantics<parallel>, #tpu.dimension_semantics<arbitrary>], iteration_bounds = array<i64: 1, 1>, scalar_prefetch = 0 : i64, scratch_operands = 1 : i64, tpu.core_type = #tpu.core_type<tc>, window_params = [{transform_indices = @transform_0, window_bounds = array<i64: 512, 4>}, {transform_indices = @transform_1, window_bounds = array<i64: 4, 8>}, {pipeline_mode = #tpu.pipeline_mode<synchronous>, transform_indices = @transform_2, window_bounds = array<i64: 1, 8>}, {transform_indices = @transform_3, window_bounds = array<i64: 512, 8>}]} {
    %c0_i32 = arith.constant 0 : i32
    %0 = arith.cmpi eq, %arg1, %c0_i32 : i32
    %1 = arith.extui %0 : i1 to i32
    %c0_i32_0 = arith.constant 0 : i32
    %2 = arith.cmpi ne, %1, %c0_i32_0 : i32
    scf.if %2 {
      %cst_10 = arith.constant 0.000000e+00 : f32
      %12 = vector.broadcast %cst_10 : f32 to vector<512x8xf32>
      %c0_11 = arith.constant 0 : index
      %c0_12 = arith.constant 0 : index
      %13 = vector.load %arg6[%c0_11, %c0_12] : memref<512x8xf32, #tpu.memory_space<vmem>>, vector<512x8xf32>
      tpu.vector_store %arg6[%c0_11, %c0_12], %12 {strides = array<i32>} : memref<512x8xf32, #tpu.memory_space<vmem>>, vector<512x8xf32>,
    } else {
    }
    %c0 = arith.constant 0 : index
    %c0_1 = arith.constant 0 : index
    %3 = vector.load %arg6[%c0, %c0_1] : memref<512x8xf32, #tpu.memory_space<vmem>>, vector<512x8xf32>
    %c0_2 = arith.constant 0 : index
    %c0_3 = arith.constant 0 : index
    %4 = vector.load %arg2[%c0_2, %c0_3] : memref<512x4xf32, #tpu.memory_space<vmem>>, vector<512x4xf32>
    %c0_4 = arith.constant 0 : index
    %c0_5 = arith.constant 0 : index
    %5 = vector.load %arg3[%c0_4, %c0_5] : memref<4x8xf32, #tpu.memory_space<vmem>>, vector<4x8xf32>
    %cst = arith.constant dense<0.000000e+00> : vector<512x8xf32>
    %6 = tpu.matmul %4, %5, %cst {dimension_numbers = #tpu.dot_dimension_numbers<[1], [0], [0], [1], [0, 0, 1, 1], [], []>} : vector<512x4xf32>, vector<4x8xf32>, vector<512x8xf32> -> vector<512x8xf32>
    %7 = arith.addf %3, %6 : vector<512x8xf32>
    %c0_6 = arith.constant 0 : index
    %c0_7 = arith.constant 0 : index
    %8 = vector.load %arg6[%c0_6, %c0_7] : memref<512x8xf32, #tpu.memory_space<vmem>>, vector<512x8xf32>
    tpu.vector_store %arg6[%c0_6, %c0_7], %7 {strides = array<i32>} : memref<512x8xf32, #tpu.memory_space<vmem>>, vector<512x8xf32>,
    %c0_i32_8 = arith.constant 0 : i32
    %9 = arith.cmpi eq, %arg1, %c0_i32_8 : i32
    %10 = arith.extui %9 : i1 to i32
    %c0_i32_9 = arith.constant 0 : i32
    %11 = arith.cmpi ne, %10, %c0_i32_9 : i32
    scf.if %11 {
      %c0_10 = arith.constant 0 : index
      %c0_11 = arith.constant 0 : index
      %12 = vector.load %arg6[%c0_10, %c0_11] : memref<512x8xf32, #tpu.memory_space<vmem>>, vector<512x8xf32>
      %c0_12 = arith.constant 0 : index
      %c0_13 = arith.constant 0 : index
      %13 = vector.load %arg4[%c0_12, %c0_13] : memref<1x8xf32, #tpu.memory_space<vmem>>, vector<1x8xf32>
      %14 = vector.broadcast %13 : vector<1x8xf32> to vector<512x8xf32>
      %15 = arith.addf %12, %14 : vector<512x8xf32>
      %cst_14 = arith.constant 0.000000e+00 : f32
      %16 = vector.broadcast %cst_14 : f32 to vector<512x8xf32>
      %17 = arith.subf %16, %15 : vector<512x8xf32>
      %18 = math.exp %17 : vector<512x8xf32>
      %cst_15 = arith.constant 1.000000e+00 : f32
      %19 = vector.broadcast %cst_15 : f32 to vector<512x8xf32>
      %20 = arith.addf %19, %18 : vector<512x8xf32>
      %cst_16 = arith.constant 1.000000e+00 : f32
      %21 = vector.broadcast %cst_16 : f32 to vector<512x8xf32>
      %22 = arith.divf %21, %20 : vector<512x8xf32>
      %23 = arith.mulf %15, %22 : vector<512x8xf32>
      %c0_17 = arith.constant 0 : index
      %c0_18 = arith.constant 0 : index
      %24 = vector.load %arg5[%c0_17, %c0_18] : memref<512x8xf32, #tpu.memory_space<vmem>>, vector<512x8xf32>
      tpu.vector_store %arg5[%c0_17, %c0_18], %23 {strides = array<i32>} : memref<512x8xf32, #tpu.memory_space<vmem>>, vector<512x8xf32>,
    } else {
    }
    return
  }
  func.func @transform_0(%arg0: i32, %arg1: i32) -> (i32, i32) {
    %c0_i32 = arith.constant 0 : i32
    return %arg0, %arg1 : i32, i32
  }
  func.func @transform_1(%arg0: i32, %arg1: i32) -> (i32, i32) {
    %c0_i32 = arith.constant 0 : i32
    %c0_i32_0 = arith.constant 0 : i32
    return %arg1, %c0_i32 : i32, i32
  }
  func.func @transform_2(%arg0: i32, %arg1: i32) -> (i32, i32) {
    %c0_i32 = arith.constant 0 : i32
    %c0_i32_0 = arith.constant 0 : i32
    %c0_i32_1 = arith.constant 0 : i32
    return %c0_i32, %c0_i32_0 : i32, i32
  }
  func.func @transform_3(%arg0: i32, %arg1: i32) -> (i32, i32) {
    %c0_i32 = arith.constant 0 : i32
    %c0_i32_0 = arith.constant 0 : i32
    return %arg0, %c0_i32 : i32, i32
  }
}

</mosaic_0001>

<llo_original>
// kernel: conv_bn_silu_forward.1
$region0: #{conv_bn_silu_forward.1}
  #allocation0 [shape = 'u32[]', space=smem, size = 0x4, offset = 0x4, fixed_abs, tag = 'smem constant byte address 0x4 - core index']
  #allocation1 [shape = 'u32[144,128]{1,0:T(1,128)}', space=vmem, size = 0x12000, scoped, tag = 'internal scratch']
  #allocation2 [shape = 'f32[512,8]{1,0:T(8,128)}', space=vmem, size = 0x40000, scoped, tag = 'scratch operand']
  %s0 = inlined_call_operand.vmem [shape: f32[512,4], index: 0, kind: input, shape index: {}]
  %s1 = inlined_call_operand.vmem [shape: f32[4,8], index: 1, kind: input, shape index: {}]
  %s2 = inlined_call_operand.vmem [shape: f32[1,8], index: 2, kind: input, shape index: {}]
  %s3 = inlined_call_operand.vmem [shape: f32[512,8], index: 3, kind: output, shape index: {}]
  %s4 = sld [smem:[#allocation0]]
  $region30: #{conv_bn_silu_forward.1} parent=0
    _
  %s6 = ssub.s32 1, %s4
  %s7 = scalar_select 0, %s6, %s4
  // Predicated region
  $region2: #{conv_bn_silu_forward.1} parent=0 // pred_check
    _
  $region3: #{conv_bn_silu_forward.1} parent=0 // pred_check_branch
    %9 = sbr.rel (0) target = $region5
  $region4: #{conv_bn_silu_forward.1} parent=0 // pred_region
    _
  $region5: #{conv_bn_silu_forward.1} parent=0 // pred_fallthru
    _
  // Predicated region
  $region6: #{conv_bn_silu_forward.1} parent=0 // pred_check
    _
  $region7: #{conv_bn_silu_forward.1} parent=0 // pred_check_branch
    %11 = sbr.rel (0) target = $region9
  $region8: #{conv_bn_silu_forward.1} parent=0 // pred_region
    _
  $region9: #{conv_bn_silu_forward.1} parent=0 // pred_fallthru
    _
  // Predicated region
  $region10: #{conv_bn_silu_forward.1} parent=0 // pred_check
    _
  $region11: #{conv_bn_silu_forward.1} parent=0 // pred_check_branch
    %13 = sbr.rel (0) target = $region13
  $region12: #{conv_bn_silu_forward.1} parent=0 // pred_region
    _
  $region13: #{conv_bn_silu_forward.1} parent=0 // pred_fallthru
    _
  %p14 = scmp.eq.s32.totalorder 0, 0
  // Predicated region
  $region14: #{conv_bn_silu_forward.1} parent=0 // pred_check
    %p15 = pneg %p14
  $region15: #{conv_bn_silu_forward.1} parent=0 // pred_check_branch
    %17 = sbr.rel (%p15) target = $region17
  $region16: #{conv_bn_silu_forward.1} parent=0 // pred_region
    %vm18 = vcmask 64512
    %19 = vst.msk [vmem:[#allocation2] sm:$0xff] %vm18, 0.0
    %20 = vst.msk [vmem:[#allocation2 + $0x8] sm:$0xff] %vm18, 0.0
    %21 = vst.msk [vmem:[#allocation2 + $0x10] sm:$0xff] %vm18, 0.0
    %22 = vst.msk [vmem:[#allocation2 + $0x18] sm:$0xff] %vm18, 0.0
    %23 = vst.msk [vmem:[#allocation2 + $0x20] sm:$0xff] %vm18, 0.0
    %24 = vst.msk [vmem:[#allocation2 + $0x28] sm:$0xff] %vm18, 0.0
    %25 = vst.msk [vmem:[#allocation2 + $0x30] sm:$0xff] %vm18, 0.0
    %26 = vst.msk [vmem:[#allocation2 + $0x38] sm:$0xff] %vm18, 0.0
    %27 = vst.msk [vmem:[#allocation2 + $0x40] sm:$0xff] %vm18, 0.0
    %28 = vst.msk [vmem:[#allocation2 + $0x48] sm:$0xff] %vm18, 0.0
    %29 = vst.msk [vmem:[#allocation2 + $0x50] sm:$0xff] %vm18, 0.0
    %30 = vst.msk [vmem:[#allocation2 + $0x58] sm:$0xff] %vm18, 0.0
    %31 = vst.msk [vmem:[#allocation2 + $0x60] sm:$0xff] %vm18, 0.0
    %32 = vst.msk [vmem:[#allocation2 + $0x68] sm:$0xff] %vm18, 0.0
    %33 = vst.msk [vmem:[#allocation2 + $0x70] sm:$0xff] %vm18, 0.0
    %34 = vst.msk [vmem:[#allocation2 + $0x78] sm:$0xff] %vm18, 0.0
    %35 = vst.msk [vmem:[#allocation2 + $0x80] sm:$0xff] %vm18, 0.0
    %36 = vst.msk [vmem:[#allocation2 + $0x88] sm:$0xff] %vm18, 0.0
    %37 = vst.msk [vmem:[#allocation2 + $0x90] sm:$0xff] %vm18, 0.0
    %38 = vst.msk [vmem:[#allocation2 + $0x98] sm:$0xff] %vm18, 0.0
    %39 = vst.msk [vmem:[#allocation2 + $0xa0] sm:$0xff] %vm18, 0.0
    %40 = vst.msk [vmem:[#allocation2 + $0xa8] sm:$0xff] %vm18, 0.0
    %41 = vst.msk [vmem:[#allocation2 + $0xb0] sm:$0xff] %vm18, 0.0
    %42 = vst.msk [vmem:[#allocation2 + $0xb8] sm:$0xff] %vm18, 0.0
    %43 = vst.msk [vmem:[#allocation2 + $0xc0] sm:$0xff] %vm18, 0.0
    %44 = vst.msk [vmem:[#allocation2 + $0xc8] sm:$0xff] %vm18, 0.0
    %45 = vst.msk [vmem:[#allocation2 + $0xd0] sm:$0xff] %vm18, 0.0
    %46 = vst.msk [vmem:[#allocation2 + $0xd8] sm:$0xff] %vm18, 0.0
    %47 = vst.msk [vmem:[#allocation2 + $0xe0] sm:$0xff] %vm18, 0.0
    %48 = vst.msk [vmem:[#allocation2 + $0xe8] sm:$0xff] %vm18, 0.0
    %49 = vst.msk [vmem:[#allocation2 + $0xf0] sm:$0xff] %vm18, 0.0
    %50 = vst.msk [vmem:[#allocation2 + $0xf8] sm:$0xff] %vm18, 0.0
    %51 = vst.msk [vmem:[#allocation2 + $0x100] sm:$0xff] %vm18, 0.0
    %52 = vst.msk [vmem:[#allocation2 + $0x108] sm:$0xff] %vm18, 0.0
    %53 = vst.msk [vmem:[#allocation2 + $0x110] sm:$0xff] %vm18, 0.0
    %54 = vst.msk [vmem:[#allocation2 + $0x118] sm:$0xff] %vm18, 0.0
    %55 = vst.msk [vmem:[#allocation2 + $0x120] sm:$0xff] %vm18, 0.0
    %56 = vst.msk [vmem:[#allocation2 + $0x128] sm:$0xff] %vm18, 0.0
    %57 = vst.msk [vmem:[#allocation2 + $0x130] sm:$0xff] %vm18, 0.0
    %58 = vst.msk [vmem:[#allocation2 + $0x138] sm:$0xff] %vm18, 0.0
    %59 = vst.msk [vmem:[#allocation2 + $0x140] sm:$0xff] %vm18, 0.0
    %60 = vst.msk [vmem:[#allocation2 + $0x148] sm:$0xff] %vm18, 0.0
    %61 = vst.msk [vmem:[#allocation2 + $0x150] sm:$0xff] %vm18, 0.0
    %62 = vst.msk [vmem:[#allocation2 + $0x158] sm:$0xff] %vm18, 0.0
    %63 = vst.msk [vmem:[#allocation2 + $0x160] sm:$0xff] %vm18, 0.0
    %64 = vst.msk [vmem:[#allocation2 + $0x168] sm:$0xff] %vm18, 0.0
    %65 = vst.msk [vmem:[#allocation2 + $0x170] sm:$0xff] %vm18, 0.0
    %66 = vst.msk [vmem:[#allocation2 + $0x178] sm:$0xff] %vm18, 0.0
    %67 = vst.msk [vmem:[#allocation2 + $0x180] sm:$0xff] %vm18, 0.0
    %68 = vst.msk [vmem:[#allocation2 + $0x188] sm:$0xff] %vm18, 0.0
    %69 = vst.msk [vmem:[#allocation2 + $0x190] sm:$0xff] %vm18, 0.0
    %70 = vst.msk [vmem:[#allocation2 + $0x198] sm:$0xff] %vm18, 0.0
    %71 = vst.msk [vmem:[#allocation2 + $0x1a0] sm:$0xff] %vm18, 0.0
    %72 = vst.msk [vmem:[#allocation2 + $0x1a8] sm:$0xff] %vm18, 0.0
    %73 = vst.msk [vmem:[#allocation2 + $0x1b0] sm:$0xff] %vm18, 0.0
    %74 = vst.msk [vmem:[#allocation2 + $0x1b8] sm:$0xff] %vm18, 0.0
    %75 = vst.msk [vmem:[#allocation2 + $0x1c0] sm:$0xff] %vm18, 0.0
    %76 = vst.msk [vmem:[#allocation2 + $0x1c8] sm:$0xff] %vm18, 0.0
    %77 = vst.msk [vmem:[#allocation2 + $0x1d0] sm:$0xff] %vm18, 0.0
    %78 = vst.msk [vmem:[#allocation2 + $0x1d8] sm:$0xff] %vm18, 0.0
    %79 = vst.msk [vmem:[#allocation2 + $0x1e0] sm:$0xff] %vm18, 0.0
    %80 = vst.msk [vmem:[#allocation2 + $0x1e8] sm:$0xff] %vm18, 0.0
    %81 = vst.msk [vmem:[#allocation2 + $0x1f0] sm:$0xff] %vm18, 0.0
    %82 = vst.msk [vmem:[#allocation2 + $0x1f8] sm:$0xff] %vm18, 0.0
  $region17: #{conv_bn_silu_forward.1} parent=0 // pred_fallthru
    _
  %v83 = vld [vmem:[#allocation2] sm:$0xff]
  %v84 = vld [vmem:[#allocation2 + $0x8] sm:$0xff]
  %v85 = vld [vmem:[#allocation2 + $0x10] sm:$0xff]
  %v86 = vld [vmem:[#allocation2 + $0x18] sm:$0xff]
  %v87 = vld [vmem:[#allocation2 + $0x20] sm:$0xff]
  %v88 = vld [vmem:[#allocation2 + $0x28] sm:$0xff]
  %v89 = vld [vmem:[#allocation2 + $0x30] sm:$0xff]
  %v90 = vld [vmem:[#allocation2 + $0x38] sm:$0xff]
  %v91 = vld [vmem:[#allocation2 + $0x40] sm:$0xff]
  %v92 = vld [vmem:[#allocation2 + $0x48] sm:$0xff]
  %v93 = vld [vmem:[#allocation2 + $0x50] sm:$0xff]
  %v94 = vld [vmem:[#allocation2 + $0x58] sm:$0xff]
  %v95 = vld [vmem:[#allocation2 + $0x60] sm:$0xff]
  %v96 = vld [vmem:[#allocation2 + $0x68] sm:$0xff]
  %v97 = vld [vmem:[#allocation2 + $0x70] sm:$0xff]
  %v98 = vld [vmem:[#allocation2 + $0x78] sm:$0xff]
  %v99 = vld [vmem:[#allocation2 + $0x80] sm:$0xff]
  %v100 = vld [vmem:[#allocation2 + $0x88] sm:$0xff]
  %v101 = vld [vmem:[#allocation2 + $0x90] sm:$0xff]
  %v102 = vld [vmem:[#allocation2 + $0x98] sm:$0xff]
  %v103 = vld [vmem:[#allocation2 + $0xa0] sm:$0xff]
  %v104 = vld [vmem:[#allocation2 + $0xa8] sm:$0xff]
  %v105 = vld [vmem:[#allocation2 + $0xb0] sm:$0xff]
  %v106 = vld [vmem:[#allocation2 + $0xb8] sm:$0xff]
  %v107 = vld [vmem:[#allocation2 + $0xc0] sm:$0xff]
  %v108 = vld [vmem:[#allocation2 + $0xc8] sm:$0xff]
  %v109 = vld [vmem:[#allocation2 + $0xd0] sm:$0xff]
  %v110 = vld [vmem:[#allocation2 + $0xd8] sm:$0xff]
  %v111 = vld [vmem:[#allocation2 + $0xe0] sm:$0xff]
  %v112 = vld [vmem:[#allocation2 + $0xe8] sm:$0xff]
  %v113 = vld [vmem:[#allocation2 + $0xf0] sm:$0xff]
  %v114 = vld [vmem:[#allocation2 + $0xf8] sm:$0xff]
  %v115 = vld [vmem:[#allocation2 + $0x100] sm:$0xff]
  %v116 = vld [vmem:[#allocation2 + $0x108] sm:$0xff]
  %v117 = vld [vmem:[#allocation2 + $0x110] sm:$0xff]
  %v118 = vld [vmem:[#allocation2 + $0x118] sm:$0xff]
  %v119 = vld [vmem:[#allocation2 + $0x120] sm:$0xff]
  %v120 = vld [vmem:[#allocation2 + $0x128] sm:$0xff]
  %v121 = vld [vmem:[#allocation2 + $0x130] sm:$0xff]
  %v122 = vld [vmem:[#allocation2 + $0x138] sm:$0xff]
  %v123 = vld [vmem:[#allocation2 + $0x140] sm:$0xff]
  %v124 = vld [vmem:[#allocation2 + $0x148] sm:$0xff]
  %v125 = vld [vmem:[#allocation2 + $0x150] sm:$0xff]
  %v126 = vld [vmem:[#allocation2 + $0x158] sm:$0xff]
  %v127 = vld [vmem:[#allocation2 + $0x160] sm:$0xff]
  %v128 = vld [vmem:[#allocation2 + $0x168] sm:$0xff]
  %v129 = vld [vmem:[#allocation2 + $0x170] sm:$0xff]
  %v130 = vld [vmem:[#allocation2 + $0x178] sm:$0xff]
  %v131 = vld [vmem:[#allocation2 + $0x180] sm:$0xff]
  %v132 = vld [vmem:[#allocation2 + $0x188] sm:$0xff]
  %v133 = vld [vmem:[#allocation2 + $0x190] sm:$0xff]
  %v134 = vld [vmem:[#allocation2 + $0x198] sm:$0xff]
  %v135 = vld [vmem:[#allocation2 + $0x1a0] sm:$0xff]
  %v136 = vld [vmem:[#allocation2 + $0x1a8] sm:$0xff]
  %v137 = vld [vmem:[#allocation2 + $0x1b0] sm:$0xff]
  %v138 = vld [vmem:[#allocation2 + $0x1b8] sm:$0xff]
  %v139 = vld [vmem:[#allocation2 + $0x1c0] sm:$0xff]
  %v140 = vld [vmem:[#allocation2 + $0x1c8] sm:$0xff]
  %v141 = vld [vmem:[#allocation2 + $0x1d0] sm:$0xff]
  %v142 = vld [vmem:[#allocation2 + $0x1d8] sm:$0xff]
  %v143 = vld [vmem:[#allocation2 + $0x1e0] sm:$0xff]
  %v144 = vld [vmem:[#allocation2 + $0x1e8] sm:$0xff]
  %v145 = vld [vmem:[#allocation2 + $0x1f0] sm:$0xff]
  %v146 = vld [vmem:[#allocation2 + $0x1f8] sm:$0xff]
  %v147 = vld [vmem:[%s0] sm:$0xff]
  %v148 = vld [vmem:[%s0 + $0x8] sm:$0xff]
  %v149 = vld [vmem:[%s0 + $0x10] sm:$0xff]
  %v150 = vld [vmem:[%s0 + $0x18] sm:$0xff]
  %v151 = vld [vmem:[%s0 + $0x20] sm:$0xff]
  %v152 = vld [vmem:[%s0 + $0x28] sm:$0xff]
  %v153 = vld [vmem:[%s0 + $0x30] sm:$0xff]
  %v154 = vld [vmem:[%s0 + $0x38] sm:$0xff]
  %v155 = vld [vmem:[%s0 + $0x40] sm:$0xff]
  %v156 = vld [vmem:[%s0 + $0x48] sm:$0xff]
  %v157 = vld [vmem:[%s0 + $0x50] sm:$0xff]
  %v158 = vld [vmem:[%s0 + $0x58] sm:$0xff]
  %v159 = vld [vmem:[%s0 + $0x60] sm:$0xff]
  %v160 = vld [vmem:[%s0 + $0x68] sm:$0xff]
  %v161 = vld [vmem:[%s0 + $0x70] sm:$0xff]
  %v162 = vld [vmem:[%s0 + $0x78] sm:$0xff]
  %v163 = vld [vmem:[%s0 + $0x80] sm:$0xff]
  %v164 = vld [vmem:[%s0 + $0x88] sm:$0xff]
  %v165 = vld [vmem:[%s0 + $0x90] sm:$0xff]
  %v166 = vld [vmem:[%s0 + $0x98] sm:$0xff]
  %v167 = vld [vmem:[%s0 + $0xa0] sm:$0xff]
  %v168 = vld [vmem:[%s0 + $0xa8] sm:$0xff]
  %v169 = vld [vmem:[%s0 + $0xb0] sm:$0xff]
  %v170 = vld [vmem:[%s0 + $0xb8] sm:$0xff]
  %v171 = vld [vmem:[%s0 + $0xc0] sm:$0xff]
  %v172 = vld [vmem:[%s0 + $0xc8] sm:$0xff]
  %v173 = vld [vmem:[%s0 + $0xd0] sm:$0xff]
  %v174 = vld [vmem:[%s0 + $0xd8] sm:$0xff]
  %v175 = vld [vmem:[%s0 + $0xe0] sm:$0xff]
  %v176 = vld [vmem:[%s0 + $0xe8] sm:$0xff]
  %v177 = vld [vmem:[%s0 + $0xf0] sm:$0xff]
  %v178 = vld [vmem:[%s0 + $0xf8] sm:$0xff]
  %v179 = vld [vmem:[%s0 + $0x100] sm:$0xff]
  %v180 = vld [vmem:[%s0 + $0x108] sm:$0xff]
  %v181 = vld [vmem:[%s0 + $0x110] sm:$0xff]
  %v182 = vld [vmem:[%s0 + $0x118] sm:$0xff]
  %v183 = vld [vmem:[%s0 + $0x120] sm:$0xff]
  %v184 = vld [vmem:[%s0 + $0x128] sm:$0xff]
  %v185 = vld [vmem:[%s0 + $0x130] sm:$0xff]
  %v186 = vld [vmem:[%s0 + $0x138] sm:$0xff]
  %v187 = vld [vmem:[%s0 + $0x140] sm:$0xff]
  %v188 = vld [vmem:[%s0 + $0x148] sm:$0xff]
  %v189 = vld [vmem:[%s0 + $0x150] sm:$0xff]
  %v190 = vld [vmem:[%s0 + $0x158] sm:$0xff]
  %v191 = vld [vmem:[%s0 + $0x160] sm:$0xff]
  %v192 = vld [vmem:[%s0 + $0x168] sm:$0xff]
  %v193 = vld [vmem:[%s0 + $0x170] sm:$0xff]
  %v194 = vld [vmem:[%s0 + $0x178] sm:$0xff]
  %v195 = vld [vmem:[%s0 + $0x180] sm:$0xff]
  %v196 = vld [vmem:[%s0 + $0x188] sm:$0xff]
  %v197 = vld [vmem:[%s0 + $0x190] sm:$0xff]
  %v198 = vld [vmem:[%s0 + $0x198] sm:$0xff]
  %v199 = vld [vmem:[%s0 + $0x1a0] sm:$0xff]
  %v200 = vld [vmem:[%s0 + $0x1a8] sm:$0xff]
  %v201 = vld [vmem:[%s0 + $0x1b0] sm:$0xff]
  %v202 = vld [vmem:[%s0 + $0x1b8] sm:$0xff]
  %v203 = vld [vmem:[%s0 + $0x1c0] sm:$0xff]
  %v204 = vld [vmem:[%s0 + $0x1c8] sm:$0xff]
  %v205 = vld [vmem:[%s0 + $0x1d0] sm:$0xff]
  %v206 = vld [vmem:[%s0 + $0x1d8] sm:$0xff]
  %v207 = vld [vmem:[%s0 + $0x1e0] sm:$0xff]
  %v208 = vld [vmem:[%s0 + $0x1e8] sm:$0xff]
  %v209 = vld [vmem:[%s0 + $0x1f0] sm:$0xff]
  %v210 = vld [vmem:[%s0 + $0x1f8] sm:$0xff]
  %v211 = vld [vmem:[%s1] sm:$0xf]
  %vm212 = vcmask 31744
  %v214 = vsel %vm212, %v147, 0
  %v217 = vsel %vm212, %v148, 0
  %v220 = vsel %vm212, %v149, 0
  %v223 = vsel %vm212, %v150, 0
  %v226 = vsel %vm212, %v151, 0
  %v229 = vsel %vm212, %v152, 0
  %v232 = vsel %vm212, %v153, 0
  %v235 = vsel %vm212, %v154, 0
  %v238 = vsel %vm212, %v155, 0
  %v241 = vsel %vm212, %v156, 0
  %v244 = vsel %vm212, %v157, 0
  %v247 = vsel %vm212, %v158, 0
  %v250 = vsel %vm212, %v159, 0
  %v253 = vsel %vm212, %v160, 0
  %v256 = vsel %vm212, %v161, 0
  %v259 = vsel %vm212, %v162, 0
  %v262 = vsel %vm212, %v163, 0
  %v265 = vsel %vm212, %v164, 0
  %v268 = vsel %vm212, %v165, 0
  %v271 = vsel %vm212, %v166, 0
  %v274 = vsel %vm212, %v167, 0
  %v277 = vsel %vm212, %v168, 0
  %v280 = vsel %vm212, %v169, 0
  %v283 = vsel %vm212, %v170, 0
  %v286 = vsel %vm212, %v171, 0
  %v289 = vsel %vm212, %v172, 0
  %v292 = vsel %vm212, %v173, 0
  %v295 = vsel %vm212, %v174, 0
  %v298 = vsel %vm212, %v175, 0
  %v301 = vsel %vm212, %v176, 0
  %v304 = vsel %vm212, %v177, 0
  %v307 = vsel %vm212, %v178, 0
  %v310 = vsel %vm212, %v179, 0
  %v313 = vsel %vm212, %v180, 0
  %v316 = vsel %vm212, %v181, 0
  %v319 = vsel %vm212, %v182, 0
  %v322 = vsel %vm212, %v183, 0
  %v325 = vsel %vm212, %v184, 0
  %v328 = vsel %vm212, %v185, 0
  %v331 = vsel %vm212, %v186, 0
  %v334 = vsel %vm212, %v187, 0
  %v337 = vsel %vm212, %v188, 0
  %v340 = vsel %vm212, %v189, 0
  %v343 = vsel %vm212, %v190, 0
  %v346 = vsel %vm212, %v191, 0
  %v349 = vsel %vm212, %v192, 0
  %v352 = vsel %vm212, %v193, 0
  %v355 = vsel %vm212, %v194, 0
  %v358 = vsel %vm212, %v195, 0
  %v361 = vsel %vm212, %v196, 0
  %v364 = vsel %vm212, %v197, 0
  %v367 = vsel %vm212, %v198, 0
  %v370 = vsel %vm212, %v199, 0
  %v373 = vsel %vm212, %v200, 0
  %v376 = vsel %vm212, %v201, 0
  %v379 = vsel %vm212, %v202, 0
  %v382 = vsel %vm212, %v203, 0
  %v385 = vsel %vm212, %v204, 0
  %v388 = vsel %vm212, %v205, 0
  %v391 = vsel %vm212, %v206, 0
  %v394 = vsel %vm212, %v207, 0
  %v397 = vsel %vm212, %v208, 0
  %v400 = vsel %vm212, %v209, 0
  %v403 = vsel %vm212, %v210, 0
  %vm405 = vcmask 1043456
  %v407 = vsel %vm405, %v211, 0
  %409 = vmatprep.subr.mxu0 0.0
  %410 = vmatpush1.msra.mxu0 %v407
  %411 = vmatprep.subr.mxu0 0.0
  %412 = vmatpush1.msra.mxu0 0.0
  %413 = vmatprep.subr.mxu0 0.0
  %414 = vmatpush1.msra.mxu0 0.0
  %415 = vmatprep.subr.mxu0 0.0
  %416 = vmatpush1.msra.mxu0 0.0
  %417 = vmatprep.subr.mxu0 0.0
  %418 = vmatpush1.msra.mxu0 0.0
  %419 = vmatprep.subr.mxu0 0.0
  %420 = vmatpush1.msra.mxu0 0.0
  %421 = vmatprep.subr.mxu0 0.0
  %422 = vmatpush1.msra.mxu0 0.0
  %423 = vmatprep.subr.mxu0 0.0
  %424 = vmatpush1.msra.mxu0 0.0
  %425 = vmatprep.subr.mxu0 0.0
  %426 = vmatpush1.msra.mxu0 0.0
  %427 = vmatprep.subr.mxu0 0.0
  %428 = vmatpush1.msra.mxu0 0.0
  %429 = vmatprep.subr.mxu0 0.0
  %430 = vmatpush1.msra.mxu0 0.0
  %431 = vmatprep.subr.mxu0 0.0
  %432 = vmatpush1.msra.mxu0 0.0
  %433 = vmatprep.subr.mxu0 0.0
  %434 = vmatpush1.msra.mxu0 0.0
  %435 = vmatprep.subr.mxu0 0.0
  %436 = vmatpush1.msra.mxu0 0.0
  %437 = vmatprep.subr.mxu0 0.0
  %438 = vmatpush1.msra.mxu0 0.0
  %439 = vmatprep.subr.mxu0 0.0
  %440 = vmatpush1.msra.mxu0 0.0
  %441 = vmatprep.subr.mxu0 0.0
  %442 = vmatpush1.msra.mxu0 0.0
  %443 = vmatprep.subr.mxu0 0.0
  %444 = vmatpush1.msra.mxu0 0.0
  %445 = vmatprep.subr.mxu0 0.0
  %446 = vmatpush1.msra.mxu0 0.0
  %447 = vmatprep.subr.mxu0 0.0
  %448 = vmatpush1.msra.mxu0 0.0
  %449 = vmatprep.subr.mxu0 0.0
  %450 = vmatpush1.msra.mxu0 0.0
  %451 = vmatprep.subr.mxu0 0.0
  %452 = vmatpush1.msra.mxu0 0.0
  %453 = vmatprep.subr.mxu0 0.0
  %454 = vmatpush1.msra.mxu0 0.0
  %455 = vmatprep.subr.mxu0 0.0
  %456 = vmatpush1.msra.mxu0 0.0
  %457 = vmatprep.subr.mxu0 0.0
  %458 = vmatpush1.msra.mxu0 0.0
  %459 = vmatprep.subr.mxu0 0.0
  %460 = vmatpush1.msra.mxu0 0.0
  %461 = vmatprep.subr.mxu0 0.0
  %462 = vmatpush1.msra.mxu0 0.0
  %463 = vmatprep.subr.mxu0 0.0
  %464 = vmatpush1.msra.mxu0 0.0
  %465 = vmatprep.subr.mxu0 0.0
  %466 = vmatpush1.msra.mxu0 0.0
  %467 = vmatprep.subr.mxu0 0.0
  %468 = vmatpush1.msra.mxu0 0.0
  %469 = vmatprep.subr.mxu0 0.0
  %470 = vmatpush1.msra.mxu0 0.0
  %471 = vmatprep.subr.mxu0 0.0
  %472 = vmatpush1.msra.mxu0 0.0
  %473 = vmatprep.mubr.f32.mxu0 0.0
  %474 = vmatmul.mubr.f32.gmra.mrb[0].mxu0 %v214
  %v475 = vpop.f32.mrb[0].mxu0
  %v476 = vadd.f32 0.0, %v475
  %v477 = vpop.f32.mrb[0].mxu0
  %478 = vmatprep.mubr.f32.mxu0 0.0
  %479 = vmatmul.mubr.f32.gmra.mrb[0].mxu0 %v217
  %v480 = vpop.f32.mrb[0].mxu0
  %v481 = vadd.f32 0.0, %v480
  %v482 = vpop.f32.mrb[0].mxu0
  %483 = vmatprep.mubr.f32.mxu0 0.0
  %484 = vmatmul.mubr.f32.gmra.mrb[0].mxu0 %v220
  %v485 = vpop.f32.mrb[0].mxu0
  %v486 = vadd.f32 0.0, %v485
  %v487 = vpop.f32.mrb[0].mxu0
  %488 = vmatprep.mubr.f32.mxu0 0.0
  %489 = vmatmul.mubr.f32.gmra.mrb[0].mxu0 %v223
  %v490 = vpop.f32.mrb[0].mxu0
  %v491 = vadd.f32 0.0, %v490
  %v492 = vpop.f32.mrb[0].mxu0
  %493 = vmatprep.mubr.f32.mxu0 0.0
  %494 = vmatmul.mubr.f32.gmra.mrb[0].mxu0 %v226
  %v495 = vpop.f32.mrb[0].mxu0
  %v496 = vadd.f32 0.0, %v495
  %v497 = vpop.f32.mrb[0].mxu0
  %498 = vmatprep.mubr.f32.mxu0 0.0
  %499 = vmatmul.mubr.f32.gmra.mrb[0].mxu0 %v229
  %v500 = vpop.f32.mrb[0].mxu0
  %v501 = vadd.f32 0.0, %v500
  %v502 = vpop.f32.mrb[0].mxu0
  %503 = vmatprep.mubr.f32.mxu0 0.0
  %504 = vmatmul.mubr.f32.gmra.mrb[0].mxu0 %v232
  %v505 = vpop.f32.mrb[0].mxu0
  %v506 = vadd.f32 0.0, %v505
  %v507 = vpop.f32.mrb[0].mxu0
  %508 = vmatprep.mubr.f32.mxu0 0.0
  %509 = vmatmul.mubr.f32.gmra.mrb[0].mxu0 %v235
  %v510 = vpop.f32.mrb[0].mxu0
  %v511 = vadd.f32 0.0, %v510
  %v512 = vpop.f32.mrb[0].mxu0
  %513 = vmatprep.mubr.f32.mxu0 0.0
  %514 = vmatmul.mubr.f32.gmra.mrb[0].mxu0 %v238
  %v515 = vpop.f32.mrb[0].mxu0
  %v516 = vadd.f32 0.0, %v515
  %v517 = vpop.f32.mrb[0].mxu0
  %518 = vmatprep.mubr.f32.mxu0 0.0
  %519 = vmatmul.mubr.f32.gmra.mrb[0].mxu0 %v241
  %v520 = vpop.f32.mrb[0].mxu0
  %v521 = vadd.f32 0.0, %v520
  %v522 = vpop.f32.mrb[0].mxu0
  %523 = vmatprep.mubr.f32.mxu0 0.0
  %524 = vmatmul.mubr.f32.gmra.mrb[0].mxu0 %v244
  %v525 = vpop.f32.mrb[0].mxu0
  %v526 = vadd.f32 0.0, %v525
  %v527 = vpop.f32.mrb[0].mxu0
  %528 = vmatprep.mubr.f32.mxu0 0.0
  %529 = vmatmul.mubr.f32.gmra.mrb[0].mxu0 %v247
  %v530 = vpop.f32.mrb[0].mxu0
  %v531 = vadd.f32 0.0, %v530
  %v532 = vpop.f32.mrb[0].mxu0
  %533 = vmatprep.mubr.f32.mxu0 0.0
  %534 = vmatmul.mubr.f32.gmra.mrb[0].mxu0 %v250
  %v535 = vpop.f32.mrb[0].mxu0
  %v536 = vadd.f32 0.0, %v535
  %v537 = vpop.f32.mrb[0].mxu0
  %538 = vmatprep.mubr.f32.mxu0 0.0
  %539 = vmatmul.mubr.f32.gmra.mrb[0].mxu0 %v253
  %v540 = vpop.f32.mrb[0].mxu0
  %v541 = vadd.f32 0.0, %v540
  %v542 = vpop.f32.mrb[0].mxu0
  %543 = vmatprep.mubr.f32.mxu0 0.0
  %544 = vmatmul.mubr.f32.gmra.mrb[0].mxu0 %v256
  %v545 = vpop.f32.mrb[0].mxu0
  %v546 = vadd.f32 0.0, %v545
  %v547 = vpop.f32.mrb[0].mxu0
  %548 = vmatprep.mubr.f32.mxu0 0.0
  %549 = vmatmul.mubr.f32.gmra.mrb[0].mxu0 %v259
  %v550 = vpop.f32.mrb[0].mxu0
  %v551 = vadd.f32 0.0, %v550
  %v552 = vpop.f32.mrb[0].mxu0
  %553 = vmatprep.mubr.f32.mxu0 0.0
  %554 = vmatmul.mubr.f32.gmra.mrb[0].mxu0 %v262
  %v555 = vpop.f32.mrb[0].mxu0
  %v556 = vadd.f32 0.0, %v555
  %v557 = vpop.f32.mrb[0].mxu0
  %558 = vmatprep.mubr.f32.mxu0 0.0
  %559 = vmatmul.mubr.f32.gmra.mrb[0].mxu0 %v265
  %v560 = vpop.f32.mrb[0].mxu0
  %v561 = vadd.f32 0.0, %v560
  %v562 = vpop.f32.mrb[0].mxu0
  %563 = vmatprep.mubr.f32.mxu0 0.0
  %564 = vmatmul.mubr.f32.gmra.mrb[0].mxu0 %v268
  %v565 = vpop.f32.mrb[0].mxu0
  %v566 = vadd.f32 0.0, %v565
  %v567 = vpop.f32.mrb[0].mxu0
  %568 = vmatprep.mubr.f32.mxu0 0.0
  %569 = vmatmul.mubr.f32.gmra.mrb[0].mxu0 %v271
  %v570 = vpop.f32.mrb[0].mxu0
  %v571 = vadd.f32 0.0, %v570
  %v572 = vpop.f32.mrb[0].mxu0
  %573 = vmatprep.mubr.f32.mxu0 0.0
  %574 = vmatmul.mubr.f32.gmra.mrb[0].mxu0 %v274
  %v575 = vpop.f32.mrb[0].mxu0
  %v576 = vadd.f32 0.0, %v575
  %v577 = vpop.f32.mrb[0].mxu0
  %578 = vmatprep.mubr.f32.mxu0 0.0
  %579 = vmatmul.mubr.f32.gmra.mrb[0].mxu0 %v277
  %v580 = vpop.f32.mrb[0].mxu0
  %v581 = vadd.f32 0.0, %v580
  %v582 = vpop.f32.mrb[0].mxu0
  %583 = vmatprep.mubr.f32.mxu0 0.0
  %584 = vmatmul.mubr.f32.gmra.mrb[0].mxu0 %v280
  %v585 = vpop.f32.mrb[0].mxu0
  %v586 = vadd.f32 0.0, %v585
  %v587 = vpop.f32.mrb[0].mxu0
  %588 = vmatprep.mubr.f32.mxu0 0.0
  %589 = vmatmul.mubr.f32.gmra.mrb[0].mxu0 %v283
  %v590 = vpop.f32.mrb[0].mxu0
  %v591 = vadd.f32 0.0, %v590
  %v592 = vpop.f32.mrb[0].mxu0
  %593 = vmatprep.mubr.f32.mxu0 0.0
  %594 = vmatmul.mubr.f32.gmra.mrb[0].mxu0 %v286
  %v595 = vpop.f32.mrb[0].mxu0
  %v596 = vadd.f32 0.0, %v595
  %v597 = vpop.f32.mrb[0].mxu0
  %598 = vmatprep.mubr.f32.mxu0 0.0
  %599 = vmatmul.mubr.f32.gmra.mrb[0].mxu0 %v289
  %v600 = vpop.f32.mrb[0].mxu0
  %v601 = vadd.f32 0.0, %v600
  %v602 = vpop.f32.mrb[0].mxu0
  %603 = vmatprep.mubr.f32.mxu0 0.0
  %604 = vmatmul.mubr.f32.gmra.mrb[0].mxu0 %v292
  %v605 = vpop.f32.mrb[0].mxu0
  %v606 = vadd.f32 0.0, %v605
  %v607 = vpop.f32.mrb[0].mxu0
  %608 = vmatprep.mubr.f32.mxu0 0.0
  %609 = vmatmul.mubr.f32.gmra.mrb[0].mxu0 %v295
  %v610 = vpop.f32.mrb[0].mxu0
  %v611 = vadd.f32 0.0, %v610
  %v612 = vpop.f32.mrb[0].mxu0
  %613 = vmatprep.mubr.f32.mxu0 0.0
  %614 = vmatmul.mubr.f32.gmra.mrb[0].mxu0 %v298
  %v615 = vpop.f32.mrb[0].mxu0
  %v616 = vadd.f32 0.0, %v615
  %v617 = vpop.f32.mrb[0].mxu0
  %618 = vmatprep.mubr.f32.mxu0 0.0
  %619 = vmatmul.mubr.f32.gmra.mrb[0].mxu0 %v301
  %v620 = vpop.f32.mrb[0].mxu0
  %v621 = vadd.f32 0.0, %v620
  %v622 = vpop.f32.mrb[0].mxu0
  %623 = vmatprep.mubr.f32.mxu0 0.0
  %624 = vmatmul.mubr.f32.gmra.mrb[0].mxu0 %v304
  %v625 = vpop.f32.mrb[0].mxu0
  %v626 = vadd.f32 0.0, %v625
  %v627 = vpop.f32.mrb[0].mxu0
  %628 = vmatprep.mubr.f32.mxu0 0.0
  %629 = vmatmul.mubr.f32.gmra.mrb[0].mxu0 %v307
  %v630 = vpop.f32.mrb[0].mxu0
  %v631 = vadd.f32 0.0, %v630
  %v632 = vpop.f32.mrb[0].mxu0
  %633 = vmatprep.mubr.f32.mxu0 0.0
  %634 = vmatmul.mubr.f32.gmra.mrb[0].mxu0 %v310
  %v635 = vpop.f32.mrb[0].mxu0
  %v636 = vadd.f32 0.0, %v635
  %v637 = vpop.f32.mrb[0].mxu0
  %638 = vmatprep.mubr.f32.mxu0 0.0
  %639 = vmatmul.mubr.f32.gmra.mrb[0].mxu0 %v313
  %v640 = vpop.f32.mrb[0].mxu0
  %v641 = vadd.f32 0.0, %v640
  %v642 = vpop.f32.mrb[0].mxu0
  %643 = vmatprep.mubr.f32.mxu0 0.0
  %644 = vmatmul.mubr.f32.gmra.mrb[0].mxu0 %v316
  %v645 = vpop.f32.mrb[0].mxu0
  %v646 = vadd.f32 0.0, %v645
  %v647 = vpop.f32.mrb[0].mxu0
  %648 = vmatprep.mubr.f32.mxu0 0.0
  %649 = vmatmul.mubr.f32.gmra.mrb[0].mxu0 %v319
  %v650 = vpop.f32.mrb[0].mxu0
  %v651 = vadd.f32 0.0, %v650
  %v652 = vpop.f32.mrb[0].mxu0
  %653 = vmatprep.mubr.f32.mxu0 0.0
  %654 = vmatmul.mubr.f32.gmra.mrb[0].mxu0 %v322
  %v655 = vpop.f32.mrb[0].mxu0
  %v656 = vadd.f32 0.0, %v655
  %v657 = vpop.f32.mrb[0].mxu0
  %658 = vmatprep.mubr.f32.mxu0 0.0
  %659 = vmatmul.mubr.f32.gmra.mrb[0].mxu0 %v325
  %v660 = vpop.f32.mrb[0].mxu0
  %v661 = vadd.f32 0.0, %v660
  %v662 = vpop.f32.mrb[0].mxu0
  %663 = vmatprep.mubr.f32.mxu0 0.0
  %664 = vmatmul.mubr.f32.gmra.mrb[0].mxu0 %v328
  %v665 = vpop.f32.mrb[0].mxu0
  %v666 = vadd.f32 0.0, %v665
  %v667 = vpop.f32.mrb[0].mxu0
  %668 = vmatprep.mubr.f32.mxu0 0.0
  %669 = vmatmul.mubr.f32.gmra.mrb[0].mxu0 %v331
  %v670 = vpop.f32.mrb[0].mxu0
  %v671 = vadd.f32 0.0, %v670
  %v672 = vpop.f32.mrb[0].mxu0
  %673 = vmatprep.mubr.f32.mxu0 0.0
  %674 = vmatmul.mubr.f32.gmra.mrb[0].mxu0 %v334
  %v675 = vpop.f32.mrb[0].mxu0
  %v676 = vadd.f32 0.0, %v675
  %v677 = vpop.f32.mrb[0].mxu0
  %678 = vmatprep.mubr.f32.mxu0 0.0
  %679 = vmatmul.mubr.f32.gmra.mrb[0].mxu0 %v337
  %v680 = vpop.f32.mrb[0].mxu0
  %v681 = vadd.f32 0.0, %v680
  %v682 = vpop.f32.mrb[0].mxu0
  %683 = vmatprep.mubr.f32.mxu0 0.0
  %684 = vmatmul.mubr.f32.gmra.mrb[0].mxu0 %v340
  %v685 = vpop.f32.mrb[0].mxu0
  %v686 = vadd.f32 0.0, %v685
  %v687 = vpop.f32.mrb[0].mxu0
  %688 = vmatprep.mubr.f32.mxu0 0.0
  %689 = vmatmul.mubr.f32.gmra.mrb[0].mxu0 %v343
  %v690 = vpop.f32.mrb[0].mxu0
  %v691 = vadd.f32 0.0, %v690
  %v692 = vpop.f32.mrb[0].mxu0
  %693 = vmatprep.mubr.f32.mxu0 0.0
  %694 = vmatmul.mubr.f32.gmra.mrb[0].mxu0 %v346
  %v695 = vpop.f32.mrb[0].mxu0
  %v696 = vadd.f32 0.0, %v695
  %v697 = vpop.f32.mrb[0].mxu0
  %698 = vmatprep.mubr.f32.mxu0 0.0
  %699 = vmatmul.mubr.f32.gmra.mrb[0].mxu0 %v349
  %v700 = vpop.f32.mrb[0].mxu0
  %v701 = vadd.f32 0.0, %v700
  %v702 = vpop.f32.mrb[0].mxu0
  %703 = vmatprep.mubr.f32.mxu0 0.0
  %704 = vmatmul.mubr.f32.gmra.mrb[0].mxu0 %v352
  %v705 = vpop.f32.mrb[0].mxu0
  %v706 = vadd.f32 0.0, %v705
  %v707 = vpop.f32.mrb[0].mxu0
  %708 = vmatprep.mubr.f32.mxu0 0.0
  %709 = vmatmul.mubr.f32.gmra.mrb[0].mxu0 %v355
  %v710 = vpop.f32.mrb[0].mxu0
  %v711 = vadd.f32 0.0, %v710
  %v712 = vpop.f32.mrb[0].mxu0
  %713 = vmatprep.mubr.f32.mxu0 0.0
  %714 = vmatmul.mubr.f32.gmra.mrb[0].mxu0 %v358
  %v715 = vpop.f32.mrb[0].mxu0
  %v716 = vadd.f32 0.0, %v715
  %v717 = vpop.f32.mrb[0].mxu0
  %718 = vmatprep.mubr.f32.mxu0 0.0
  %719 = vmatmul.mubr.f32.gmra.mrb[0].mxu0 %v361
  %v720 = vpop.f32.mrb[0].mxu0
  %v721 = vadd.f32 0.0, %v720
  %v722 = vpop.f32.mrb[0].mxu0
  %723 = vmatprep.mubr.f32.mxu0 0.0
  %724 = vmatmul.mubr.f32.gmra.mrb[0].mxu0 %v364
  %v725 = vpop.f32.mrb[0].mxu0
  %v726 = vadd.f32 0.0, %v725
  %v727 = vpop.f32.mrb[0].mxu0
  %728 = vmatprep.mubr.f32.mxu0 0.0
  %729 = vmatmul.mubr.f32.gmra.mrb[0].mxu0 %v367
  %v730 = vpop.f32.mrb[0].mxu0
  %v731 = vadd.f32 0.0, %v730
  %v732 = vpop.f32.mrb[0].mxu0
  %733 = vmatprep.mubr.f32.mxu0 0.0
  %734 = vmatmul.mubr.f32.gmra.mrb[0].mxu0 %v370
  %v735 = vpop.f32.mrb[0].mxu0
  %v736 = vadd.f32 0.0, %v735
  %v737 = vpop.f32.mrb[0].mxu0
  %738 = vmatprep.mubr.f32.mxu0 0.0
  %739 = vmatmul.mubr.f32.gmra.mrb[0].mxu0 %v373
  %v740 = vpop.f32.mrb[0].mxu0
  %v741 = vadd.f32 0.0, %v740
  %v742 = vpop.f32.mrb[0].mxu0
  %743 = vmatprep.mubr.f32.mxu0 0.0
  %744 = vmatmul.mubr.f32.gmra.mrb[0].mxu0 %v376
  %v745 = vpop.f32.mrb[0].mxu0
  %v746 = vadd.f32 0.0, %v745
  %v747 = vpop.f32.mrb[0].mxu0
  %748 = vmatprep.mubr.f32.mxu0 0.0
  %749 = vmatmul.mubr.f32.gmra.mrb[0].mxu0 %v379
  %v750 = vpop.f32.mrb[0].mxu0
  %v751 = vadd.f32 0.0, %v750
  %v752 = vpop.f32.mrb[0].mxu0
  %753 = vmatprep.mubr.f32.mxu0 0.0
  %754 = vmatmul.mubr.f32.gmra.mrb[0].mxu0 %v382
  %v755 = vpop.f32.mrb[0].mxu0
  %v756 = vadd.f32 0.0, %v755
  %v757 = vpop.f32.mrb[0].mxu0
  %758 = vmatprep.mubr.f32.mxu0 0.0
  %759 = vmatmul.mubr.f32.gmra.mrb[0].mxu0 %v385
  %v760 = vpop.f32.mrb[0].mxu0
  %v761 = vadd.f32 0.0, %v760
  %v762 = vpop.f32.mrb[0].mxu0
  %763 = vmatprep.mubr.f32.mxu0 0.0
  %764 = vmatmul.mubr.f32.gmra.mrb[0].mxu0 %v388
  %v765 = vpop.f32.mrb[0].mxu0
  %v766 = vadd.f32 0.0, %v765
  %v767 = vpop.f32.mrb[0].mxu0
  %768 = vmatprep.mubr.f32.mxu0 0.0
  %769 = vmatmul.mubr.f32.gmra.mrb[0].mxu0 %v391
  %v770 = vpop.f32.mrb[0].mxu0
  %v771 = vadd.f32 0.0, %v770
  %v772 = vpop.f32.mrb[0].mxu0
  %773 = vmatprep.mubr.f32.mxu0 0.0
  %774 = vmatmul.mubr.f32.gmra.mrb[0].mxu0 %v394
  %v775 = vpop.f32.mrb[0].mxu0
  %v776 = vadd.f32 0.0, %v775
  %v777 = vpop.f32.mrb[0].mxu0
  %778 = vmatprep.mubr.f32.mxu0 0.0
  %779 = vmatmul.mubr.f32.gmra.mrb[0].mxu0 %v397
  %v780 = vpop.f32.mrb[0].mxu0
  %v781 = vadd.f32 0.0, %v780
  %v782 = vpop.f32.mrb[0].mxu0
  %783 = vmatprep.mubr.f32.mxu0 0.0
  %784 = vmatmul.mubr.f32.gmra.mrb[0].mxu0 %v400
  %v785 = vpop.f32.mrb[0].mxu0
  %v786 = vadd.f32 0.0, %v785
  %v787 = vpop.f32.mrb[0].mxu0
  %788 = vmatprep.mubr.f32.mxu0 0.0
  %789 = vmatmul.mubr.f32.gmra.mrb[0].mxu0 %v403
  %v790 = vpop.f32.mrb[0].mxu0
  %v791 = vadd.f32 0.0, %v790
  %v792 = vpop.f32.mrb[0].mxu0
  %793 = vdwg.mxu0
  %v794 = vadd.f32 %v83, %v476
  %v795 = vadd.f32 %v84, %v481
  %v796 = vadd.f32 %v85, %v486
  %v797 = vadd.f32 %v86, %v491
  %v798 = vadd.f32 %v87, %v496
  %v799 = vadd.f32 %v88, %v501
  %v800 = vadd.f32 %v89, %v506
  %v801 = vadd.f32 %v90, %v511
  %v802 = vadd.f32 %v91, %v516
  %v803 = vadd.f32 %v92, %v521
  %v804 = vadd.f32 %v93, %v526
  %v805 = vadd.f32 %v94, %v531
  %v806 = vadd.f32 %v95, %v536
  %v807 = vadd.f32 %v96, %v541
  %v808 = vadd.f32 %v97, %v546
  %v809 = vadd.f32 %v98, %v551
  %v810 = vadd.f32 %v99, %v556
  %v811 = vadd.f32 %v100, %v561
  %v812 = vadd.f32 %v101, %v566
  %v813 = vadd.f32 %v102, %v571
  %v814 = vadd.f32 %v103, %v576
  %v815 = vadd.f32 %v104, %v581
  %v816 = vadd.f32 %v105, %v586
  %v817 = vadd.f32 %v106, %v591
  %v818 = vadd.f32 %v107, %v596
  %v819 = vadd.f32 %v108, %v601
  %v820 = vadd.f32 %v109, %v606
  %v821 = vadd.f32 %v110, %v611
  %v822 = vadd.f32 %v111, %v616
  %v823 = vadd.f32 %v112, %v621
  %v824 = vadd.f32 %v113, %v626
  %v825 = vadd.f32 %v114, %v631
  %v826 = vadd.f32 %v115, %v636
  %v827 = vadd.f32 %v116, %v641
  %v828 = vadd.f32 %v117, %v646
  %v829 = vadd.f32 %v118, %v651
  %v830 = vadd.f32 %v119, %v656
  %v831 = vadd.f32 %v120, %v661
  %v832 = vadd.f32 %v121, %v666
  %v833 = vadd.f32 %v122, %v671
  %v834 = vadd.f32 %v123, %v676
  %v835 = vadd.f32 %v124, %v681
  %v836 = vadd.f32 %v125, %v686
  %v837 = vadd.f32 %v126, %v691
  %v838 = vadd.f32 %v127, %v696
  %v839 = vadd.f32 %v128, %v701
  %v840 = vadd.f32 %v129, %v706
  %v841 = vadd.f32 %v130, %v711
  %v842 = vadd.f32 %v131, %v716
  %v843 = vadd.f32 %v132, %v721
  %v844 = vadd.f32 %v133, %v726
  %v845 = vadd.f32 %v134, %v731
  %v846 = vadd.f32 %v135, %v736
  %v847 = vadd.f32 %v136, %v741
  %v848 = vadd.f32 %v137, %v746
  %v849 = vadd.f32 %v138, %v751
  %v850 = vadd.f32 %v139, %v756
  %v851 = vadd.f32 %v140, %v761
  %v852 = vadd.f32 %v141, %v766
  %v853 = vadd.f32 %v142, %v771
  %v854 = vadd.f32 %v143, %v776
  %v855 = vadd.f32 %v144, %v781
  %v856 = vadd.f32 %v145, %v786
  %v857 = vadd.f32 %v146, %v791
  %vm858 = vcmask 64512
  %859 = vst.msk [vmem:[#allocation2] sm:$0xff] %vm858, %v794
  %860 = vst.msk [vmem:[#allocation2 + $0x8] sm:$0xff] %vm858, %v795
  %861 = vst.msk [vmem:[#allocation2 + $0x10] sm:$0xff] %vm858, %v796
  %862 = vst.msk [vmem:[#allocation2 + $0x18] sm:$0xff] %vm858, %v797
  %863 = vst.msk [vmem:[#allocation2 + $0x20] sm:$0xff] %vm858, %v798
  %864 = vst.msk [vmem:[#allocation2 + $0x28] sm:$0xff] %vm858, %v799
  %865 = vst.msk [vmem:[#allocation2 + $0x30] sm:$0xff] %vm858, %v800
  %866 = vst.msk [vmem:[#allocation2 + $0x38] sm:$0xff] %vm858, %v801
  %867 = vst.msk [vmem:[#allocation2 + $0x40] sm:$0xff] %vm858, %v802
  %868 = vst.msk [vmem:[#allocation2 + $0x48] sm:$0xff] %vm858, %v803
  %869 = vst.msk [vmem:[#allocation2 + $0x50] sm:$0xff] %vm858, %v804
  %870 = vst.msk [vmem:[#allocation2 + $0x58] sm:$0xff] %vm858, %v805
  %871 = vst.msk [vmem:[#allocation2 + $0x60] sm:$0xff] %vm858, %v806
  %872 = vst.msk [vmem:[#allocation2 + $0x68] sm:$0xff] %vm858, %v807
  %873 = vst.msk [vmem:[#allocation2 + $0x70] sm:$0xff] %vm858, %v808
  %874 = vst.msk [vmem:[#allocation2 + $0x78] sm:$0xff] %vm858, %v809
  %875 = vst.msk [vmem:[#allocation2 + $0x80] sm:$0xff] %vm858, %v810
  %876 = vst.msk [vmem:[#allocation2 + $0x88] sm:$0xff] %vm858, %v811
  %877 = vst.msk [vmem:[#allocation2 + $0x90] sm:$0xff] %vm858, %v812
  %878 = vst.msk [vmem:[#allocation2 + $0x98] sm:$0xff] %vm858, %v813
  %879 = vst.msk [vmem:[#allocation2 + $0xa0] sm:$0xff] %vm858, %v814
  %880 = vst.msk [vmem:[#allocation2 + $0xa8] sm:$0xff] %vm858, %v815
  %881 = vst.msk [vmem:[#allocation2 + $0xb0] sm:$0xff] %vm858, %v816
  %882 = vst.msk [vmem:[#allocation2 + $0xb8] sm:$0xff] %vm858, %v817
  %883 = vst.msk [vmem:[#allocation2 + $0xc0] sm:$0xff] %vm858, %v818
  %884 = vst.msk [vmem:[#allocation2 + $0xc8] sm:$0xff] %vm858, %v819
  %885 = vst.msk [vmem:[#allocation2 + $0xd0] sm:$0xff] %vm858, %v820
  %886 = vst.msk [vmem:[#allocation2 + $0xd8] sm:$0xff] %vm858, %v821
  %887 = vst.msk [vmem:[#allocation2 + $0xe0] sm:$0xff] %vm858, %v822
  %888 = vst.msk [vmem:[#allocation2 + $0xe8] sm:$0xff] %vm858, %v823
  %889 = vst.msk [vmem:[#allocation2 + $0xf0] sm:$0xff] %vm858, %v824
  %890 = vst.msk [vmem:[#allocation2 + $0xf8] sm:$0xff] %vm858, %v825
  %891 = vst.msk [vmem:[#allocation2 + $0x100] sm:$0xff] %vm858, %v826
  %892 = vst.msk [vmem:[#allocation2 + $0x108] sm:$0xff] %vm858, %v827
  %893 = vst.msk [vmem:[#allocation2 + $0x110] sm:$0xff] %vm858, %v828
  %894 = vst.msk [vmem:[#allocation2 + $0x118] sm:$0xff] %vm858, %v829
  %895 = vst.msk [vmem:[#allocation2 + $0x120] sm:$0xff] %vm858, %v830
  %896 = vst.msk [vmem:[#allocation2 + $0x128] sm:$0xff] %vm858, %v831
  %897 = vst.msk [vmem:[#allocation2 + $0x130] sm:$0xff] %vm858, %v832
  %898 = vst.msk [vmem:[#allocation2 + $0x138] sm:$0xff] %vm858, %v833
  %899 = vst.msk [vmem:[#allocation2 + $0x140] sm:$0xff] %vm858, %v834
  %900 = vst.msk [vmem:[#allocation2 + $0x148] sm:$0xff] %vm858, %v835
  %901 = vst.msk [vmem:[#allocation2 + $0x150] sm:$0xff] %vm858, %v836
  %902 = vst.msk [vmem:[#allocation2 + $0x158] sm:$0xff] %vm858, %v837
  %903 = vst.msk [vmem:[#allocation2 + $0x160] sm:$0xff] %vm858, %v838
  %904 = vst.msk [vmem:[#allocation2 + $0x168] sm:$0xff] %vm858, %v839
  %905 = vst.msk [vmem:[#allocation2 + $0x170] sm:$0xff] %vm858, %v840
  %906 = vst.msk [vmem:[#allocation2 + $0x178] sm:$0xff] %vm858, %v841
  %907 = vst.msk [vmem:[#allocation2 + $0x180] sm:$0xff] %vm858, %v842
  %908 = vst.msk [vmem:[#allocation2 + $0x188] sm:$0xff] %vm858, %v843
  %909 = vst.msk [vmem:[#allocation2 + $0x190] sm:$0xff] %vm858, %v844
  %910 = vst.msk [vmem:[#allocation2 + $0x198] sm:$0xff] %vm858, %v845
  %911 = vst.msk [vmem:[#allocation2 + $0x1a0] sm:$0xff] %vm858, %v846
  %912 = vst.msk [vmem:[#allocation2 + $0x1a8] sm:$0xff] %vm858, %v847
  %913 = vst.msk [vmem:[#allocation2 + $0x1b0] sm:$0xff] %vm858, %v848
  %914 = vst.msk [vmem:[#allocation2 + $0x1b8] sm:$0xff] %vm858, %v849
  %915 = vst.msk [vmem:[#allocation2 + $0x1c0] sm:$0xff] %vm858, %v850
  %916 = vst.msk [vmem:[#allocation2 + $0x1c8] sm:$0xff] %vm858, %v851
  %917 = vst.msk [vmem:[#allocation2 + $0x1d0] sm:$0xff] %vm858, %v852
  %918 = vst.msk [vmem:[#allocation2 + $0x1d8] sm:$0xff] %vm858, %v853
  %919 = vst.msk [vmem:[#allocation2 + $0x1e0] sm:$0xff] %vm858, %v854
  %920 = vst.msk [vmem:[#allocation2 + $0x1e8] sm:$0xff] %vm858, %v855
  %921 = vst.msk [vmem:[#allocation2 + $0x1f0] sm:$0xff] %vm858, %v856
  %922 = vst.msk [vmem:[#allocation2 + $0x1f8] sm:$0xff] %vm858, %v857
  // Predicated region
  $region18: #{conv_bn_silu_forward.1} parent=0 // pred_check
    %p923 = pneg %p14
  $region19: #{conv_bn_silu_forward.1} parent=0 // pred_check_branch
    %925 = sbr.rel (%p923) target = $region21
  $region20: #{conv_bn_silu_forward.1} parent=0 // pred_region
    %v926 = vld [vmem:[#allocation2] sm:$0xff]
    %v927 = vld [vmem:[#allocation2 + $0x8] sm:$0xff]
    %v928 = vld [vmem:[#allocation2 + $0x10] sm:$0xff]
    %v929 = vld [vmem:[#allocation2 + $0x18] sm:$0xff]
    %v930 = vld [vmem:[#allocation2 + $0x20] sm:$0xff]
    %v931 = vld [vmem:[#allocation2 + $0x28] sm:$0xff]
    %v932 = vld [vmem:[#allocation2 + $0x30] sm:$0xff]
    %v933 = vld [vmem:[#allocation2 + $0x38] sm:$0xff]
    %v934 = vld [vmem:[#allocation2 + $0x40] sm:$0xff]
    %v935 = vld [vmem:[#allocation2 + $0x48] sm:$0xff]
    %v936 = vld [vmem:[#allocation2 + $0x50] sm:$0xff]
    %v937 = vld [vmem:[#allocation2 + $0x58] sm:$0xff]
    %v938 = vld [vmem:[#allocation2 + $0x60] sm:$0xff]
    %v939 = vld [vmem:[#allocation2 + $0x68] sm:$0xff]
    %v940 = vld [vmem:[#allocation2 + $0x70] sm:$0xff]
    %v941 = vld [vmem:[#allocation2 + $0x78] sm:$0xff]
    %v942 = vld [vmem:[#allocation2 + $0x80] sm:$0xff]
    %v943 = vld [vmem:[#allocation2 + $0x88] sm:$0xff]
    %v944 = vld [vmem:[#allocation2 + $0x90] sm:$0xff]
    %v945 = vld [vmem:[#allocation2 + $0x98] sm:$0xff]
    %v946 = vld [vmem:[#allocation2 + $0xa0] sm:$0xff]
    %v947 = vld [vmem:[#allocation2 + $0xa8] sm:$0xff]
    %v948 = vld [vmem:[#allocation2 + $0xb0] sm:$0xff]
    %v949 = vld [vmem:[#allocation2 + $0xb8] sm:$0xff]
    %v950 = vld [vmem:[#allocation2 + $0xc0] sm:$0xff]
    %v951 = vld [vmem:[#allocation2 + $0xc8] sm:$0xff]
    %v952 = vld [vmem:[#allocation2 + $0xd0] sm:$0xff]
    %v953 = vld [vmem:[#allocation2 + $0xd8] sm:$0xff]
    %v954 = vld [vmem:[#allocation2 + $0xe0] sm:$0xff]
    %v955 = vld [vmem:[#allocation2 + $0xe8] sm:$0xff]
    %v956 = vld [vmem:[#allocation2 + $0xf0] sm:$0xff]
    %v957 = vld [vmem:[#allocation2 + $0xf8] sm:$0xff]
    %v958 = vld [vmem:[#allocation2 + $0x100] sm:$0xff]
    %v959 = vld [vmem:[#allocation2 + $0x108] sm:$0xff]
    %v960 = vld [vmem:[#allocation2 + $0x110] sm:$0xff]
    %v961 = vld [vmem:[#allocation2 + $0x118] sm:$0xff]
    %v962 = vld [vmem:[#allocation2 + $0x120] sm:$0xff]
    %v963 = vld [vmem:[#allocation2 + $0x128] sm:$0xff]
    %v964 = vld [vmem:[#allocation2 + $0x130] sm:$0xff]
    %v965 = vld [vmem:[#allocation2 + $0x138] sm:$0xff]
    %v966 = vld [vmem:[#allocation2 + $0x140] sm:$0xff]
    %v967 = vld [vmem:[#allocation2 + $0x148] sm:$0xff]
    %v968 = vld [vmem:[#allocation2 + $0x150] sm:$0xff]
    %v969 = vld [vmem:[#allocation2 + $0x158] sm:$0xff]
    %v970 = vld [vmem:[#allocation2 + $0x160] sm:$0xff]
    %v971 = vld [vmem:[#allocation2 + $0x168] sm:$0xff]
    %v972 = vld [vmem:[#allocation2 + $0x170] sm:$0xff]
    %v973 = vld [vmem:[#allocation2 + $0x178] sm:$0xff]
    %v974 = vld [vmem:[#allocation2 + $0x180] sm:$0xff]
    %v975 = vld [vmem:[#allocation2 + $0x188] sm:$0xff]
    %v976 = vld [vmem:[#allocation2 + $0x190] sm:$0xff]
    %v977 = vld [vmem:[#allocation2 + $0x198] sm:$0xff]
    %v978 = vld [vmem:[#allocation2 + $0x1a0] sm:$0xff]
    %v979 = vld [vmem:[#allocation2 + $0x1a8] sm:$0xff]
    %v980 = vld [vmem:[#allocation2 + $0x1b0] sm:$0xff]
    %v981 = vld [vmem:[#allocation2 + $0x1b8] sm:$0xff]
    %v982 = vld [vmem:[#allocation2 + $0x1c0] sm:$0xff]
    %v983 = vld [vmem:[#allocation2 + $0x1c8] sm:$0xff]
    %v984 = vld [vmem:[#allocation2 + $0x1d0] sm:$0xff]
    %v985 = vld [vmem:[#allocation2 + $0x1d8] sm:$0xff]
    %v986 = vld [vmem:[#allocation2 + $0x1e0] sm:$0xff]
    %v987 = vld [vmem:[#allocation2 + $0x1e8] sm:$0xff]
    %v988 = vld [vmem:[#allocation2 + $0x1f0] sm:$0xff]
    %v989 = vld [vmem:[#allocation2 + $0x1f8] sm:$0xff]
    %v990 = vld [vmem:[%s2] sm:$0x1]
    %v992 = vlaneseq
    %v993 = vshrl.u32 %v992, 7
    %v994 = vsub.s32 0, %v993
    %v995 = vrot.slane %v990, %v994
    %v997 = vadd.f32 %v926, %v995
    %v998 = vadd.f32 %v927, %v995
    %v999 = vadd.f32 %v928, %v995
    %v1000 = vadd.f32 %v929, %v995
    %v1001 = vadd.f32 %v930, %v995
    %v1002 = vadd.f32 %v931, %v995
    %v1003 = vadd.f32 %v932, %v995
    %v1004 = vadd.f32 %v933, %v995
    %v1005 = vadd.f32 %v934, %v995
    %v1006 = vadd.f32 %v935, %v995
    %v1007 = vadd.f32 %v936, %v995
    %v1008 = vadd.f32 %v937, %v995
    %v1009 = vadd.f32 %v938, %v995
    %v1010 = vadd.f32 %v939, %v995
    %v1011 = vadd.f32 %v940, %v995
    %v1012 = vadd.f32 %v941, %v995
    %v1013 = vadd.f32 %v942, %v995
    %v1014 = vadd.f32 %v943, %v995
    %v1015 = vadd.f32 %v944, %v995
    %v1016 = vadd.f32 %v945, %v995
    %v1017 = vadd.f32 %v946, %v995
    %v1018 = vadd.f32 %v947, %v995
    %v1019 = vadd.f32 %v948, %v995
    %v1020 = vadd.f32 %v949, %v995
    %v1021 = vadd.f32 %v950, %v995
    %v1022 = vadd.f32 %v951, %v995
    %v1023 = vadd.f32 %v952, %v995
    %v1024 = vadd.f32 %v953, %v995
    %v1025 = vadd.f32 %v954, %v995
    %v1026 = vadd.f32 %v955, %v995
    %v1027 = vadd.f32 %v956, %v995
    %v1028 = vadd.f32 %v957, %v995
    %v1029 = vadd.f32 %v958, %v995
    %v1030 = vadd.f32 %v959, %v995
    %v1031 = vadd.f32 %v960, %v995
    %v1032 = vadd.f32 %v961, %v995
    %v1033 = vadd.f32 %v962, %v995
    %v1034 = vadd.f32 %v963, %v995
    %v1035 = vadd.f32 %v964, %v995
    %v1036 = vadd.f32 %v965, %v995
    %v1037 = vadd.f32 %v966, %v995
    %v1038 = vadd.f32 %v967, %v995
    %v1039 = vadd.f32 %v968, %v995
    %v1040 = vadd.f32 %v969, %v995
    %v1041 = vadd.f32 %v970, %v995
    %v1042 = vadd.f32 %v971, %v995
    %v1043 = vadd.f32 %v972, %v995
    %v1044 = vadd.f32 %v973, %v995
    %v1045 = vadd.f32 %v974, %v995
    %v1046 = vadd.f32 %v975, %v995
    %v1047 = vadd.f32 %v976, %v995
    %v1048 = vadd.f32 %v977, %v995
    %v1049 = vadd.f32 %v978, %v995
    %v1050 = vadd.f32 %v979, %v995
    %v1051 = vadd.f32 %v980, %v995
    %v1052 = vadd.f32 %v981, %v995
    %v1053 = vadd.f32 %v982, %v995
    %v1054 = vadd.f32 %v983, %v995
    %v1055 = vadd.f32 %v984, %v995
    %v1056 = vadd.f32 %v985, %v995
    %v1057 = vadd.f32 %v986, %v995
    %v1058 = vadd.f32 %v987, %v995
    %v1059 = vadd.f32 %v988, %v995
    %v1060 = vadd.f32 %v989, %v995
    %v1061 = vsub.f32 0.0, %v997
    %v1062 = vsub.f32 0.0, %v998
    %v1063 = vsub.f32 0.0, %v999
    %v1064 = vsub.f32 0.0, %v1000
    %v1065 = vsub.f32 0.0, %v1001
    %v1066 = vsub.f32 0.0, %v1002
    %v1067 = vsub.f32 0.0, %v1003
    %v1068 = vsub.f32 0.0, %v1004
    %v1069 = vsub.f32 0.0, %v1005
    %v1070 = vsub.f32 0.0, %v1006
    %v1071 = vsub.f32 0.0, %v1007
    %v1072 = vsub.f32 0.0, %v1008
    %v1073 = vsub.f32 0.0, %v1009
    %v1074 = vsub.f32 0.0, %v1010
    %v1075 = vsub.f32 0.0, %v1011
    %v1076 = vsub.f32 0.0, %v1012
    %v1077 = vsub.f32 0.0, %v1013
    %v1078 = vsub.f32 0.0, %v1014
    %v1079 = vsub.f32 0.0, %v1015
    %v1080 = vsub.f32 0.0, %v1016
    %v1081 = vsub.f32 0.0, %v1017
    %v1082 = vsub.f32 0.0, %v1018
    %v1083 = vsub.f32 0.0, %v1019
    %v1084 = vsub.f32 0.0, %v1020
    %v1085 = vsub.f32 0.0, %v1021
    %v1086 = vsub.f32 0.0, %v1022
    %v1087 = vsub.f32 0.0, %v1023
    %v1088 = vsub.f32 0.0, %v1024
    %v1089 = vsub.f32 0.0, %v1025
    %v1090 = vsub.f32 0.0, %v1026
    %v1091 = vsub.f32 0.0, %v1027
    %v1092 = vsub.f32 0.0, %v1028
    %v1093 = vsub.f32 0.0, %v1029
    %v1094 = vsub.f32 0.0, %v1030
    %v1095 = vsub.f32 0.0, %v1031
    %v1096 = vsub.f32 0.0, %v1032
    %v1097 = vsub.f32 0.0, %v1033
    %v1098 = vsub.f32 0.0, %v1034
    %v1099 = vsub.f32 0.0, %v1035
    %v1100 = vsub.f32 0.0, %v1036
    %v1101 = vsub.f32 0.0, %v1037
    %v1102 = vsub.f32 0.0, %v1038
    %v1103 = vsub.f32 0.0, %v1039
    %v1104 = vsub.f32 0.0, %v1040
    %v1105 = vsub.f32 0.0, %v1041
    %v1106 = vsub.f32 0.0, %v1042
    %v1107 = vsub.f32 0.0, %v1043
    %v1108 = vsub.f32 0.0, %v1044
    %v1109 = vsub.f32 0.0, %v1045
    %v1110 = vsub.f32 0.0, %v1046
    %v1111 = vsub.f32 0.0, %v1047
    %v1112 = vsub.f32 0.0, %v1048
    %v1113 = vsub.f32 0.0, %v1049
    %v1114 = vsub.f32 0.0, %v1050
    %v1115 = vsub.f32 0.0, %v1051
    %v1116 = vsub.f32 0.0, %v1052
    %v1117 = vsub.f32 0.0, %v1053
    %v1118 = vsub.f32 0.0, %v1054
    %v1119 = vsub.f32 0.0, %v1055
    %v1120 = vsub.f32 0.0, %v1056
    %v1121 = vsub.f32 0.0, %v1057
    %v1122 = vsub.f32 0.0, %v1058
    %v1123 = vsub.f32 0.0, %v1059
    %v1124 = vsub.f32 0.0, %v1060
    %v1125 = vmul.f32 %v1061, 1.442695
    %v1126 = vpow.pop %v1125
    %v1127 = vmul.f32 %v1062, 1.442695
    %v1128 = vpow.pop %v1127
    %v1129 = vmul.f32 %v1063, 1.442695
    %v1130 = vpow.pop %v1129
    %v1131 = vmul.f32 %v1064, 1.442695
    %v1132 = vpow.pop %v1131
    %v1133 = vmul.f32 %v1065, 1.442695
    %v1134 = vpow.pop %v1133
    %v1135 = vmul.f32 %v1066, 1.442695
    %v1136 = vpow.pop %v1135
    %v1137 = vmul.f32 %v1067, 1.442695
    %v1138 = vpow.pop %v1137
    %v1139 = vmul.f32 %v1068, 1.442695
    %v1140 = vpow.pop %v1139
    %v1141 = vmul.f32 %v1069, 1.442695
    %v1142 = vpow.pop %v1141
    %v1143 = vmul.f32 %v1070, 1.442695
    %v1144 = vpow.pop %v1143
    %v1145 = vmul.f32 %v1071, 1.442695
    %v1146 = vpow.pop %v1145
    %v1147 = vmul.f32 %v1072, 1.442695
    %v1148 = vpow.pop %v1147
    %v1149 = vmul.f32 %v1073, 1.442695
    %v1150 = vpow.pop %v1149
    %v1151 = vmul.f32 %v1074, 1.442695
    %v1152 = vpow.pop %v1151
    %v1153 = vmul.f32 %v1075, 1.442695
    %v1154 = vpow.pop %v1153
    %v1155 = vmul.f32 %v1076, 1.442695
    %v1156 = vpow.pop %v1155
    %v1157 = vmul.f32 %v1077, 1.442695
    %v1158 = vpow.pop %v1157
    %v1159 = vmul.f32 %v1078, 1.442695
    %v1160 = vpow.pop %v1159
    %v1161 = vmul.f32 %v1079, 1.442695
    %v1162 = vpow.pop %v1161
    %v1163 = vmul.f32 %v1080, 1.442695
    %v1164 = vpow.pop %v1163
    %v1165 = vmul.f32 %v1081, 1.442695
    %v1166 = vpow.pop %v1165
    %v1167 = vmul.f32 %v1082, 1.442695
    %v1168 = vpow.pop %v1167
    %v1169 = vmul.f32 %v1083, 1.442695
    %v1170 = vpow.pop %v1169
    %v1171 = vmul.f32 %v1084, 1.442695
    %v1172 = vpow.pop %v1171
    %v1173 = vmul.f32 %v1085, 1.442695
    %v1174 = vpow.pop %v1173
    %v1175 = vmul.f32 %v1086, 1.442695
    %v1176 = vpow.pop %v1175
    %v1177 = vmul.f32 %v1087, 1.442695
    %v1178 = vpow.pop %v1177
    %v1179 = vmul.f32 %v1088, 1.442695
    %v1180 = vpow.pop %v1179
    %v1181 = vmul.f32 %v1089, 1.442695
    %v1182 = vpow.pop %v1181
    %v1183 = vmul.f32 %v1090, 1.442695
    %v1184 = vpow.pop %v1183
    %v1185 = vmul.f32 %v1091, 1.442695
    %v1186 = vpow.pop %v1185
    %v1187 = vmul.f32 %v1092, 1.442695
    %v1188 = vpow.pop %v1187
    %v1189 = vmul.f32 %v1093, 1.442695
    %v1190 = vpow.pop %v1189
    %v1191 = vmul.f32 %v1094, 1.442695
    %v1192 = vpow.pop %v1191
    %v1193 = vmul.f32 %v1095, 1.442695
    %v1194 = vpow.pop %v1193
    %v1195 = vmul.f32 %v1096, 1.442695
    %v1196 = vpow.pop %v1195
    %v1197 = vmul.f32 %v1097, 1.442695
    %v1198 = vpow.pop %v1197
    %v1199 = vmul.f32 %v1098, 1.442695
    %v1200 = vpow.pop %v1199
    %v1201 = vmul.f32 %v1099, 1.442695
    %v1202 = vpow.pop %v1201
    %v1203 = vmul.f32 %v1100, 1.442695
    %v1204 = vpow.pop %v1203
    %v1205 = vmul.f32 %v1101, 1.442695
    %v1206 = vpow.pop %v1205
    %v1207 = vmul.f32 %v1102, 1.442695
    %v1208 = vpow.pop %v1207
    %v1209 = vmul.f32 %v1103, 1.442695
    %v1210 = vpow.pop %v1209
    %v1211 = vmul.f32 %v1104, 1.442695
    %v1212 = vpow.pop %v1211
    %v1213 = vmul.f32 %v1105, 1.442695
    %v1214 = vpow.pop %v1213
    %v1215 = vmul.f32 %v1106, 1.442695
    %v1216 = vpow.pop %v1215
    %v1217 = vmul.f32 %v1107, 1.442695
    %v1218 = vpow.pop %v1217
    %v1219 = vmul.f32 %v1108, 1.442695
    %v1220 = vpow.pop %v1219
    %v1221 = vmul.f32 %v1109, 1.442695
    %v1222 = vpow.pop %v1221
    %v1223 = vmul.f32 %v1110, 1.442695
    %v1224 = vpow.pop %v1223
    %v1225 = vmul.f32 %v1111, 1.442695
    %v1226 = vpow.pop %v1225
    %v1227 = vmul.f32 %v1112, 1.442695
    %v1228 = vpow.pop %v1227
    %v1229 = vmul.f32 %v1113, 1.442695
    %v1230 = vpow.pop %v1229
    %v1231 = vmul.f32 %v1114, 1.442695
    %v1232 = vpow.pop %v1231
    %v1233 = vmul.f32 %v1115, 1.442695
    %v1234 = vpow.pop %v1233
    %v1235 = vmul.f32 %v1116, 1.442695
    %v1236 = vpow.pop %v1235
    %v1237 = vmul.f32 %v1117, 1.442695
    %v1238 = vpow.pop %v1237
    %v1239 = vmul.f32 %v1118, 1.442695
    %v1240 = vpow.pop %v1239
    %v1241 = vmul.f32 %v1119, 1.442695
    %v1242 = vpow.pop %v1241
    %v1243 = vmul.f32 %v1120, 1.442695
    %v1244 = vpow.pop %v1243
    %v1245 = vmul.f32 %v1121, 1.442695
    %v1246 = vpow.pop %v1245
    %v1247 = vmul.f32 %v1122, 1.442695
    %v1248 = vpow.pop %v1247
    %v1249 = vmul.f32 %v1123, 1.442695
    %v1250 = vpow.pop %v1249
    %v1251 = vmul.f32 %v1124, 1.442695
    %v1252 = vpow.pop %v1251
    %v1253 = vadd.f32 %v1126, 1.0
    %v1254 = vadd.f32 %v1128, 1.0
    %v1255 = vadd.f32 %v1130, 1.0
    %v1256 = vadd.f32 %v1132, 1.0
    %v1257 = vadd.f32 %v1134, 1.0
    %v1258 = vadd.f32 %v1136, 1.0
    %v1259 = vadd.f32 %v1138, 1.0
    %v1260 = vadd.f32 %v1140, 1.0
    %v1261 = vadd.f32 %v1142, 1.0
    %v1262 = vadd.f32 %v1144, 1.0
    %v1263 = vadd.f32 %v1146, 1.0
    %v1264 = vadd.f32 %v1148, 1.0
    %v1265 = vadd.f32 %v1150, 1.0
    %v1266 = vadd.f32 %v1152, 1.0
    %v1267 = vadd.f32 %v1154, 1.0
    %v1268 = vadd.f32 %v1156, 1.0
    %v1269 = vadd.f32 %v1158, 1.0
    %v1270 = vadd.f32 %v1160, 1.0
    %v1271 = vadd.f32 %v1162, 1.0
    %v1272 = vadd.f32 %v1164, 1.0
    %v1273 = vadd.f32 %v1166, 1.0
    %v1274 = vadd.f32 %v1168, 1.0
    %v1275 = vadd.f32 %v1170, 1.0
    %v1276 = vadd.f32 %v1172, 1.0
    %v1277 = vadd.f32 %v1174, 1.0
    %v1278 = vadd.f32 %v1176, 1.0
    %v1279 = vadd.f32 %v1178, 1.0
    %v1280 = vadd.f32 %v1180, 1.0
    %v1281 = vadd.f32 %v1182, 1.0
    %v1282 = vadd.f32 %v1184, 1.0
    %v1283 = vadd.f32 %v1186, 1.0
    %v1284 = vadd.f32 %v1188, 1.0
    %v1285 = vadd.f32 %v1190, 1.0
    %v1286 = vadd.f32 %v1192, 1.0
    %v1287 = vadd.f32 %v1194, 1.0
    %v1288 = vadd.f32 %v1196, 1.0
    %v1289 = vadd.f32 %v1198, 1.0
    %v1290 = vadd.f32 %v1200, 1.0
    %v1291 = vadd.f32 %v1202, 1.0
    %v1292 = vadd.f32 %v1204, 1.0
    %v1293 = vadd.f32 %v1206, 1.0
    %v1294 = vadd.f32 %v1208, 1.0
    %v1295 = vadd.f32 %v1210, 1.0
    %v1296 = vadd.f32 %v1212, 1.0
    %v1297 = vadd.f32 %v1214, 1.0
    %v1298 = vadd.f32 %v1216, 1.0
    %v1299 = vadd.f32 %v1218, 1.0
    %v1300 = vadd.f32 %v1220, 1.0
    %v1301 = vadd.f32 %v1222, 1.0
    %v1302 = vadd.f32 %v1224, 1.0
    %v1303 = vadd.f32 %v1226, 1.0
    %v1304 = vadd.f32 %v1228, 1.0
    %v1305 = vadd.f32 %v1230, 1.0
    %v1306 = vadd.f32 %v1232, 1.0
    %v1307 = vadd.f32 %v1234, 1.0
    %v1308 = vadd.f32 %v1236, 1.0
    %v1309 = vadd.f32 %v1238, 1.0
    %v1310 = vadd.f32 %v1240, 1.0
    %v1311 = vadd.f32 %v1242, 1.0
    %v1312 = vadd.f32 %v1244, 1.0
    %v1313 = vadd.f32 %v1246, 1.0
    %v1314 = vadd.f32 %v1248, 1.0
    %v1315 = vadd.f32 %v1250, 1.0
    %v1316 = vadd.f32 %v1252, 1.0
    %v1317 = vrcp.pop %v1253
    %v1318 = vmul.f32 1.0, %v1317
    %v1319 = vrcp.pop %v1254
    %v1320 = vmul.f32 1.0, %v1319
    %v1321 = vrcp.pop %v1255
    %v1322 = vmul.f32 1.0, %v1321
    %v1323 = vrcp.pop %v1256
    %v1324 = vmul.f32 1.0, %v1323
    %v1325 = vrcp.pop %v1257
    %v1326 = vmul.f32 1.0, %v1325
    %v1327 = vrcp.pop %v1258
    %v1328 = vmul.f32 1.0, %v1327
    %v1329 = vrcp.pop %v1259
    %v1330 = vmul.f32 1.0, %v1329
    %v1331 = vrcp.pop %v1260
    %v1332 = vmul.f32 1.0, %v1331
    %v1333 = vrcp.pop %v1261
    %v1334 = vmul.f32 1.0, %v1333
    %v1335 = vrcp.pop %v1262
    %v1336 = vmul.f32 1.0, %v1335
    %v1337 = vrcp.pop %v1263
    %v1338 = vmul.f32 1.0, %v1337
    %v1339 = vrcp.pop %v1264
    %v1340 = vmul.f32 1.0, %v1339
    %v1341 = vrcp.pop %v1265
    %v1342 = vmul.f32 1.0, %v1341
    %v1343 = vrcp.pop %v1266
    %v1344 = vmul.f32 1.0, %v1343
    %v1345 = vrcp.pop %v1267
    %v1346 = vmul.f32 1.0, %v1345
    %v1347 = vrcp.pop %v1268
    %v1348 = vmul.f32 1.0, %v1347
    %v1349 = vrcp.pop %v1269
    %v1350 = vmul.f32 1.0, %v1349
    %v1351 = vrcp.pop %v1270
    %v1352 = vmul.f32 1.0, %v1351
    %v1353 = vrcp.pop %v1271
    %v1354 = vmul.f32 1.0, %v1353
    %v1355 = vrcp.pop %v1272
    %v1356 = vmul.f32 1.0, %v1355
    %v1357 = vrcp.pop %v1273
    %v1358 = vmul.f32 1.0, %v1357
    %v1359 = vrcp.pop %v1274
    %v1360 = vmul.f32 1.0, %v1359
    %v1361 = vrcp.pop %v1275
    %v1362 = vmul.f32 1.0, %v1361
    %v1363 = vrcp.pop %v1276
    %v1364 = vmul.f32 1.0, %v1363
    %v1365 = vrcp.pop %v1277
    %v1366 = vmul.f32 1.0, %v1365
    %v1367 = vrcp.pop %v1278
    %v1368 = vmul.f32 1.0, %v1367
    %v1369 = vrcp.pop %v1279
    %v1370 = vmul.f32 1.0, %v1369
    %v1371 = vrcp.pop %v1280
    %v1372 = vmul.f32 1.0, %v1371
    %v1373 = vrcp.pop %v1281
    %v1374 = vmul.f32 1.0, %v1373
    %v1375 = vrcp.pop %v1282
    %v1376 = vmul.f32 1.0, %v1375
    %v1377 = vrcp.pop %v1283
    %v1378 = vmul.f32 1.0, %v1377
    %v1379 = vrcp.pop %v1284
    %v1380 = vmul.f32 1.0, %v1379
    %v1381 = vrcp.pop %v1285
    %v1382 = vmul.f32 1.0, %v1381
    %v1383 = vrcp.pop %v1286
    %v1384 = vmul.f32 1.0, %v1383
    %v1385 = vrcp.pop %v1287
    %v1386 = vmul.f32 1.0, %v1385
    %v1387 = vrcp.pop %v1288
    %v1388 = vmul.f32 1.0, %v1387
    %v1389 = vrcp.pop %v1289
    %v1390 = vmul.f32 1.0, %v1389
    %v1391 = vrcp.pop %v1290
    %v1392 = vmul.f32 1.0, %v1391
    %v1393 = vrcp.pop %v1291
    %v1394 = vmul.f32 1.0, %v1393
    %v1395 = vrcp.pop %v1292
    %v1396 = vmul.f32 1.0, %v1395
    %v1397 = vrcp.pop %v1293
    %v1398 = vmul.f32 1.0, %v1397
    %v1399 = vrcp.pop %v1294
    %v1400 = vmul.f32 1.0, %v1399
    %v1401 = vrcp.pop %v1295
    %v1402 = vmul.f32 1.0, %v1401
    %v1403 = vrcp.pop %v1296
    %v1404 = vmul.f32 1.0, %v1403
    %v1405 = vrcp.pop %v1297
    %v1406 = vmul.f32 1.0, %v1405
    %v1407 = vrcp.pop %v1298
    %v1408 = vmul.f32 1.0, %v1407
    %v1409 = vrcp.pop %v1299
    %v1410 = vmul.f32 1.0, %v1409
    %v1411 = vrcp.pop %v1300
    %v1412 = vmul.f32 1.0, %v1411
    %v1413 = vrcp.pop %v1301
    %v1414 = vmul.f32 1.0, %v1413
    %v1415 = vrcp.pop %v1302
    %v1416 = vmul.f32 1.0, %v1415
    %v1417 = vrcp.pop %v1303
    %v1418 = vmul.f32 1.0, %v1417
    %v1419 = vrcp.pop %v1304
    %v1420 = vmul.f32 1.0, %v1419
    %v1421 = vrcp.pop %v1305
    %v1422 = vmul.f32 1.0, %v1421
    %v1423 = vrcp.pop %v1306
    %v1424 = vmul.f32 1.0, %v1423
    %v1425 = vrcp.pop %v1307
    %v1426 = vmul.f32 1.0, %v1425
    %v1427 = vrcp.pop %v1308
    %v1428 = vmul.f32 1.0, %v1427
    %v1429 = vrcp.pop %v1309
    %v1430 = vmul.f32 1.0, %v1429
    %v1431 = vrcp.pop %v1310
    %v1432 = vmul.f32 1.0, %v1431
    %v1433 = vrcp.pop %v1311
    %v1434 = vmul.f32 1.0, %v1433
    %v1435 = vrcp.pop %v1312
    %v1436 = vmul.f32 1.0, %v1435
    %v1437 = vrcp.pop %v1313
    %v1438 = vmul.f32 1.0, %v1437
    %v1439 = vrcp.pop %v1314
    %v1440 = vmul.f32 1.0, %v1439
    %v1441 = vrcp.pop %v1315
    %v1442 = vmul.f32 1.0, %v1441
    %v1443 = vrcp.pop %v1316
    %v1444 = vmul.f32 1.0, %v1443
    %v1445 = vmul.f32 %v997, %v1318
    %v1446 = vmul.f32 %v998, %v1320
    %v1447 = vmul.f32 %v999, %v1322
    %v1448 = vmul.f32 %v1000, %v1324
    %v1449 = vmul.f32 %v1001, %v1326
    %v1450 = vmul.f32 %v1002, %v1328
    %v1451 = vmul.f32 %v1003, %v1330
    %v1452 = vmul.f32 %v1004, %v1332
    %v1453 = vmul.f32 %v1005, %v1334
    %v1454 = vmul.f32 %v1006, %v1336
    %v1455 = vmul.f32 %v1007, %v1338
    %v1456 = vmul.f32 %v1008, %v1340
    %v1457 = vmul.f32 %v1009, %v1342
    %v1458 = vmul.f32 %v1010, %v1344
    %v1459 = vmul.f32 %v1011, %v1346
    %v1460 = vmul.f32 %v1012, %v1348
    %v1461 = vmul.f32 %v1013, %v1350
    %v1462 = vmul.f32 %v1014, %v1352
    %v1463 = vmul.f32 %v1015, %v1354
    %v1464 = vmul.f32 %v1016, %v1356
    %v1465 = vmul.f32 %v1017, %v1358
    %v1466 = vmul.f32 %v1018, %v1360
    %v1467 = vmul.f32 %v1019, %v1362
    %v1468 = vmul.f32 %v1020, %v1364
    %v1469 = vmul.f32 %v1021, %v1366
    %v1470 = vmul.f32 %v1022, %v1368
    %v1471 = vmul.f32 %v1023, %v1370
    %v1472 = vmul.f32 %v1024, %v1372
    %v1473 = vmul.f32 %v1025, %v1374
    %v1474 = vmul.f32 %v1026, %v1376
    %v1475 = vmul.f32 %v1027, %v1378
    %v1476 = vmul.f32 %v1028, %v1380
    %v1477 = vmul.f32 %v1029, %v1382
    %v1478 = vmul.f32 %v1030, %v1384
    %v1479 = vmul.f32 %v1031, %v1386
    %v1480 = vmul.f32 %v1032, %v1388
    %v1481 = vmul.f32 %v1033, %v1390
    %v1482 = vmul.f32 %v1034, %v1392
    %v1483 = vmul.f32 %v1035, %v1394
    %v1484 = vmul.f32 %v1036, %v1396
    %v1485 = vmul.f32 %v1037, %v1398
    %v1486 = vmul.f32 %v1038, %v1400
    %v1487 = vmul.f32 %v1039, %v1402
    %v1488 = vmul.f32 %v1040, %v1404
    %v1489 = vmul.f32 %v1041, %v1406
    %v1490 = vmul.f32 %v1042, %v1408
    %v1491 = vmul.f32 %v1043, %v1410
    %v1492 = vmul.f32 %v1044, %v1412
    %v1493 = vmul.f32 %v1045, %v1414
    %v1494 = vmul.f32 %v1046, %v1416
    %v1495 = vmul.f32 %v1047, %v1418
    %v1496 = vmul.f32 %v1048, %v1420
    %v1497 = vmul.f32 %v1049, %v1422
    %v1498 = vmul.f32 %v1050, %v1424
    %v1499 = vmul.f32 %v1051, %v1426
    %v1500 = vmul.f32 %v1052, %v1428
    %v1501 = vmul.f32 %v1053, %v1430
    %v1502 = vmul.f32 %v1054, %v1432
    %v1503 = vmul.f32 %v1055, %v1434
    %v1504 = vmul.f32 %v1056, %v1436
    %v1505 = vmul.f32 %v1057, %v1438
    %v1506 = vmul.f32 %v1058, %v1440
    %v1507 = vmul.f32 %v1059, %v1442
    %v1508 = vmul.f32 %v1060, %v1444
    %1509 = vst.msk [vmem:[%s3] sm:$0xff] %vm858, %v1445
    %1510 = vst.msk [vmem:[%s3 + $0x8] sm:$0xff] %vm858, %v1446
    %1511 = vst.msk [vmem:[%s3 + $0x10] sm:$0xff] %vm858, %v1447
    %1512 = vst.msk [vmem:[%s3 + $0x18] sm:$0xff] %vm858, %v1448
    %1513 = vst.msk [vmem:[%s3 + $0x20] sm:$0xff] %vm858, %v1449
    %1514 = vst.msk [vmem:[%s3 + $0x28] sm:$0xff] %vm858, %v1450
    %1515 = vst.msk [vmem:[%s3 + $0x30] sm:$0xff] %vm858, %v1451
    %1516 = vst.msk [vmem:[%s3 + $0x38] sm:$0xff] %vm858, %v1452
    %1517 = vst.msk [vmem:[%s3 + $0x40] sm:$0xff] %vm858, %v1453
    %1518 = vst.msk [vmem:[%s3 + $0x48] sm:$0xff] %vm858, %v1454
    %1519 = vst.msk [vmem:[%s3 + $0x50] sm:$0xff] %vm858, %v1455
    %1520 = vst.msk [vmem:[%s3 + $0x58] sm:$0xff] %vm858, %v1456
    %1521 = vst.msk [vmem:[%s3 + $0x60] sm:$0xff] %vm858, %v1457
    %1522 = vst.msk [vmem:[%s3 + $0x68] sm:$0xff] %vm858, %v1458
    %1523 = vst.msk [vmem:[%s3 + $0x70] sm:$0xff] %vm858, %v1459
    %1524 = vst.msk [vmem:[%s3 + $0x78] sm:$0xff] %vm858, %v1460
    %1525 = vst.msk [vmem:[%s3 + $0x80] sm:$0xff] %vm858, %v1461
    %1526 = vst.msk [vmem:[%s3 + $0x88] sm:$0xff] %vm858, %v1462
    %1527 = vst.msk [vmem:[%s3 + $0x90] sm:$0xff] %vm858, %v1463
    %1528 = vst.msk [vmem:[%s3 + $0x98] sm:$0xff] %vm858, %v1464
    %1529 = vst.msk [vmem:[%s3 + $0xa0] sm:$0xff] %vm858, %v1465
    %1530 = vst.msk [vmem:[%s3 + $0xa8] sm:$0xff] %vm858, %v1466
    %1531 = vst.msk [vmem:[%s3 + $0xb0] sm:$0xff] %vm858, %v1467
    %1532 = vst.msk [vmem:[%s3 + $0xb8] sm:$0xff] %vm858, %v1468
    %1533 = vst.msk [vmem:[%s3 + $0xc0] sm:$0xff] %vm858, %v1469
    %1534 = vst.msk [vmem:[%s3 + $0xc8] sm:$0xff] %vm858, %v1470
    %1535 = vst.msk [vmem:[%s3 + $0xd0] sm:$0xff] %vm858, %v1471
    %1536 = vst.msk [vmem:[%s3 + $0xd8] sm:$0xff] %vm858, %v1472
    %1537 = vst.msk [vmem:[%s3 + $0xe0] sm:$0xff] %vm858, %v1473
    %1538 = vst.msk [vmem:[%s3 + $0xe8] sm:$0xff] %vm858, %v1474
    %1539 = vst.msk [vmem:[%s3 + $0xf0] sm:$0xff] %vm858, %v1475
    %1540 = vst.msk [vmem:[%s3 + $0xf8] sm:$0xff] %vm858, %v1476
    %1541 = vst.msk [vmem:[%s3 + $0x100] sm:$0xff] %vm858, %v1477
    %1542 = vst.msk [vmem:[%s3 + $0x108] sm:$0xff] %vm858, %v1478
    %1543 = vst.msk [vmem:[%s3 + $0x110] sm:$0xff] %vm858, %v1479
    %1544 = vst.msk [vmem:[%s3 + $0x118] sm:$0xff] %vm858, %v1480
    %1545 = vst.msk [vmem:[%s3 + $0x120] sm:$0xff] %vm858, %v1481
    %1546 = vst.msk [vmem:[%s3 + $0x128] sm:$0xff] %vm858, %v1482
    %1547 = vst.msk [vmem:[%s3 + $0x130] sm:$0xff] %vm858, %v1483
    %1548 = vst.msk [vmem:[%s3 + $0x138] sm:$0xff] %vm858, %v1484
    %1549 = vst.msk [vmem:[%s3 + $0x140] sm:$0xff] %vm858, %v1485
    %1550 = vst.msk [vmem:[%s3 + $0x148] sm:$0xff] %vm858, %v1486
    %1551 = vst.msk [vmem:[%s3 + $0x150] sm:$0xff] %vm858, %v1487
    %1552 = vst.msk [vmem:[%s3 + $0x158] sm:$0xff] %vm858, %v1488
    %1553 = vst.msk [vmem:[%s3 + $0x160] sm:$0xff] %vm858, %v1489
    %1554 = vst.msk [vmem:[%s3 + $0x168] sm:$0xff] %vm858, %v1490
    %1555 = vst.msk [vmem:[%s3 + $0x170] sm:$0xff] %vm858, %v1491
    %1556 = vst.msk [vmem:[%s3 + $0x178] sm:$0xff] %vm858, %v1492
    %1557 = vst.msk [vmem:[%s3 + $0x180] sm:$0xff] %vm858, %v1493
    %1558 = vst.msk [vmem:[%s3 + $0x188] sm:$0xff] %vm858, %v1494
    %1559 = vst.msk [vmem:[%s3 + $0x190] sm:$0xff] %vm858, %v1495
    %1560 = vst.msk [vmem:[%s3 + $0x198] sm:$0xff] %vm858, %v1496
    %1561 = vst.msk [vmem:[%s3 + $0x1a0] sm:$0xff] %vm858, %v1497
    %1562 = vst.msk [vmem:[%s3 + $0x1a8] sm:$0xff] %vm858, %v1498
    %1563 = vst.msk [vmem:[%s3 + $0x1b0] sm:$0xff] %vm858, %v1499
    %1564 = vst.msk [vmem:[%s3 + $0x1b8] sm:$0xff] %vm858, %v1500
    %1565 = vst.msk [vmem:[%s3 + $0x1c0] sm:$0xff] %vm858, %v1501
    %1566 = vst.msk [vmem:[%s3 + $0x1c8] sm:$0xff] %vm858, %v1502
    %1567 = vst.msk [vmem:[%s3 + $0x1d0] sm:$0xff] %vm858, %v1503
    %1568 = vst.msk [vmem:[%s3 + $0x1d8] sm:$0xff] %vm858, %v1504
    %1569 = vst.msk [vmem:[%s3 + $0x1e0] sm:$0xff] %vm858, %v1505
    %1570 = vst.msk [vmem:[%s3 + $0x1e8] sm:$0xff] %vm858, %v1506
    %1571 = vst.msk [vmem:[%s3 + $0x1f0] sm:$0xff] %vm858, %v1507
    %1572 = vst.msk [vmem:[%s3 + $0x1f8] sm:$0xff] %vm858, %v1508
  $region21: #{conv_bn_silu_forward.1} parent=0 // pred_fallthru
    _
  // Predicated region
  $region22: #{conv_bn_silu_forward.1} parent=0 // pred_check
    _
  $region23: #{conv_bn_silu_forward.1} parent=0 // pred_check_branch
    %1574 = sbr.rel (0) target = $region25
  $region24: #{conv_bn_silu_forward.1} parent=0 // pred_region
    _
  $region25: #{conv_bn_silu_forward.1} parent=0 // pred_fallthru
    _
  // Predicated region
  $region26: #{conv_bn_silu_forward.1} parent=0 // pred_check
    _
  $region27: #{conv_bn_silu_forward.1} parent=0 // pred_check_branch
    %1576 = sbr.rel (0) target = $region29
  $region28: #{conv_bn_silu_forward.1} parent=0 // pred_region
    _
  $region29: #{conv_bn_silu_forward.1} parent=0 // pred_fallthru
    _

</llo_original>
